<compile_context>
chip_gen: v5e
topology: v5e:2x2
jax: 0.10.0
libtpu: 0.0.40
codegen_flags: <defaults>
</compile_context>

<pallas_src>
import functools

import jax
import jax.numpy as jnp
from jax.experimental import pallas as pl
from jax.experimental.pallas import tpu as pltpu


NEG_SLOPE = 0.01          # nn.LeakyReLU default negative_slope
HIDDEN = 400
HIDDEN_PAD = 512          # pad 400 -> 512 for full MXU / lane tiles


def _round_up(n, m):
    return ((n + m - 1) // m) * m


def _leaky_relu(v):
    return jnp.where(v > 0, v, NEG_SLOPE * v)


def dqn_kernel(x_ref, w1_ref, b1_ref, w2_ref, b2_ref,
               w3_ref, b3_ref, w4_ref, b4_ref, o_ref):
    # x_ref: [TM, in_dim] bf16 tile; wK_ref: bf16 (in, out); bK_ref: f32 [1, out]
    cdt = w1_ref.dtype
    x = x_ref[...]
    h = _leaky_relu(
        jnp.dot(x, w1_ref[...], preferred_element_type=jnp.float32) + b1_ref[...])
    h = _leaky_relu(
        jnp.dot(h.astype(cdt), w2_ref[...], preferred_element_type=jnp.float32)
        + b2_ref[...])
    h = _leaky_relu(
        jnp.dot(h.astype(cdt), w3_ref[...], preferred_element_type=jnp.float32)
        + b3_ref[...])
    out = (jnp.dot(h.astype(cdt), w4_ref[...], preferred_element_type=jnp.float32)
           + b4_ref[...])
    o_ref[...] = out.astype(o_ref.dtype)


def prepare_dqn_params(params, compute_dtype=jnp.bfloat16):
    """One-time prep (outside the per-call hot path):
    transpose PyTorch-layout (out,in) weights to (in,out), zero-pad the hidden
    dimension 400 -> 512 (zeros are neutral through bias-add/LeakyReLU because
    the matching bias entries and next-layer weight rows are also zero), and
    cast weights to bf16. Biases stay f32."""
    def pad_to(a, shape):
        return jnp.pad(a, [(0, t - s) for s, t in zip(a.shape, shape)])

    w1 = params["w1"].T          # (in_dim, 400)
    w2 = params["w2"].T          # (400, 400)
    w3 = params["w3"].T          # (400, 400)
    w4 = params["w4"].T          # (400, out_dim)
    in_dim = w1.shape[0]
    out_dim = w4.shape[1]
    hp = HIDDEN_PAD
    return {
        "w1": pad_to(w1, (in_dim, hp)).astype(compute_dtype),
        "w2": pad_to(w2, (hp, hp)).astype(compute_dtype),
        "w3": pad_to(w3, (hp, hp)).astype(compute_dtype),
        "w4": pad_to(w4, (hp, out_dim)).astype(compute_dtype),
        "b1": pad_to(params["b1"], (hp,)).reshape(1, hp).astype(jnp.float32),
        "b2": pad_to(params["b2"], (hp,)).reshape(1, hp).astype(jnp.float32),
        "b3": pad_to(params["b3"], (hp,)).reshape(1, hp).astype(jnp.float32),
        "b4": params["b4"].reshape(1, out_dim).astype(jnp.float32),
    }


@functools.partial(jax.jit, static_argnames=("block_b",))
def dqn_forward(x, prepped, block_b=256):
    """x: any array with leading batch dim (e.g. NCHW). prepped: prepare_dqn_params output."""
    B = x.shape[0]
    x_flat = x.reshape(B, -1)                      # torch.flatten(x, 1)
    in_dim = x_flat.shape[1]
    out_dim = prepped["w4"].shape[1]
    cdt = prepped["w1"].dtype

    # Pad batch so the batch tile divides the (padded) batch exactly.
    bp = _round_up(max(B, 8), 8)
    tm = min(block_b, bp)
    bp = _round_up(bp, tm)
    if bp != B:
        x_flat = jnp.pad(x_flat, ((0, bp - B), (0, 0)))
    x_flat = x_flat.astype(cdt)

    grid = (bp // tm,)

    def resident(arr):
        # Full-extent block, constant block index -> stays VMEM-resident
        # across all grid steps (weights DMA'd once).
        return pl.BlockSpec(arr.shape, lambda i: (0, 0))

    out = pl.pallas_call(
        dqn_kernel,
        out_shape=jax.ShapeDtypeStruct((bp, out_dim), jnp.float32),
        grid=grid,
        in_specs=[
            pl.BlockSpec((tm, in_dim), lambda i: (i, 0)),
            resident(prepped["w1"]), resident(prepped["b1"]),
            resident(prepped["w2"]), resident(prepped["b2"]),
            resident(prepped["w3"]), resident(prepped["b3"]),
            resident(prepped["w4"]), resident(prepped["b4"]),
        ],
        out_specs=pl.BlockSpec((tm, out_dim), lambda i: (i, 0)),
        compiler_params=pltpu.CompilerParams(
            dimension_semantics=("parallel",)),
    )(x_flat,
      prepped["w1"], prepped["b1"], prepped["w2"], prepped["b2"],
      prepped["w3"], prepped["b3"], prepped["w4"], prepped["b4"])

    return out[:B]


def init_dqn_params(key, in_dim, out_dim, hidden=HIDDEN):
    """Deterministic init matching the module: xavier_uniform_ weights,
    PyTorch-default uniform(-1/sqrt(fan_in), 1/sqrt(fan_in)) biases.
    Weights stored PyTorch-style as (out_features, in_features)."""
    dims = [(in_dim, hidden), (hidden, hidden), (hidden, hidden), (hidden, out_dim)]
    params = {}
    keys = jax.random.split(key, 2 * len(dims))
    for i, (fan_in, fan_out) in enumerate(dims):
        wk, bk = keys[2 * i], keys[2 * i + 1]
        bound_w = (6.0 / (fan_in + fan_out)) ** 0.5          # xavier_uniform_
        params[f"w{i+1}"] = jax.random.uniform(
            wk, (fan_out, fan_in), jnp.float32, -bound_w, bound_w)
        bound_b = 1.0 / (fan_in ** 0.5)
        params[f"b{i+1}"] = jax.random.uniform(
            bk, (fan_out,), jnp.float32, -bound_b, bound_b)
    return params


if __name__ == "__main__":
    key = jax.random.PRNGKey(0)
    k_param, k_x = jax.random.split(key)

    # Small state tensor (NCHW-like): batch=2, channels=4, spatial=2x2 -> in_dim=16
    B, C, H, W = 2, 4, 2, 2
    in_dim = C * H * W
    out_dim = 8  # number of actions

    params = init_dqn_params(k_param, in_dim, out_dim)
    prepped = prepare_dqn_params(params)            # one-time: transpose/pad/cast
    x = jax.random.normal(k_x, (B, C, H, W), dtype=jnp.float32)

    out = dqn_forward(x, prepped)
    out = jax.block_until_ready(out)
    assert out.shape == (B, out_dim)

    # Reference in plain f32 JAX (same math as the PyTorch module).
    xf = x.reshape(B, -1)
    ref = xf
    for i in range(1, 4):
        ref = ref @ params[f"w{i}"].T + params[f"b{i}"]
        ref = jnp.where(ref > 0, ref, NEG_SLOPE * ref)
    ref = ref @ params["w4"].T + params["b4"]

    # bf16 matmul inputs -> relaxed tolerance vs the f32 reference.
    rel_err = jnp.max(jnp.abs(out - ref)) / (jnp.max(jnp.abs(ref)) + 1e-6)
    assert rel_err < 5e-2, f"relative error too large: {rel_err}"

    print("KERNEL_OK")
</pallas_src>

<mosaic_0001>
module attributes {stable_mosaic.version = 11 : i64} {
  func.func @dqn_kernel(%arg0: i32, %arg1: memref<8x16xbf16, #tpu.memory_space<vmem>>, %arg2: memref<16x512xbf16, #tpu.memory_space<vmem>>, %arg3: memref<1x512xf32, #tpu.memory_space<vmem>>, %arg4: memref<512x512xbf16, #tpu.memory_space<vmem>>, %arg5: memref<1x512xf32, #tpu.memory_space<vmem>>, %arg6: memref<512x512xbf16, #tpu.memory_space<vmem>>, %arg7: memref<1x512xf32, #tpu.memory_space<vmem>>, %arg8: memref<512x8xbf16, #tpu.memory_space<vmem>>, %arg9: memref<1x8xf32, #tpu.memory_space<vmem>>, %arg10: memref<8x8xf32, #tpu.memory_space<vmem>>) attributes {dimension_semantics = [#tpu.dimension_semantics<parallel>], iteration_bounds = array<i64: 1>, scalar_prefetch = 0 : i64, scratch_operands = 0 : i64, tpu.core_type = #tpu.core_type<tc>, window_params = [{transform_indices = @transform_0, window_bounds = array<i64: 8, 16>}, {pipeline_mode = #tpu.pipeline_mode<synchronous>, transform_indices = @transform_1, window_bounds = array<i64: 16, 512>}, {pipeline_mode = #tpu.pipeline_mode<synchronous>, transform_indices = @transform_2, window_bounds = array<i64: 1, 512>}, {pipeline_mode = #tpu.pipeline_mode<synchronous>, transform_indices = @transform_3, window_bounds = array<i64: 512, 512>}, {pipeline_mode = #tpu.pipeline_mode<synchronous>, transform_indices = @transform_4, window_bounds = array<i64: 1, 512>}, {pipeline_mode = #tpu.pipeline_mode<synchronous>, transform_indices = @transform_5, window_bounds = array<i64: 512, 512>}, {pipeline_mode = #tpu.pipeline_mode<synchronous>, transform_indices = @transform_6, window_bounds = array<i64: 1, 512>}, {pipeline_mode = #tpu.pipeline_mode<synchronous>, transform_indices = @transform_7, window_bounds = array<i64: 512, 8>}, {pipeline_mode = #tpu.pipeline_mode<synchronous>, transform_indices = @transform_8, window_bounds = array<i64: 1, 8>}, {transform_indices = @transform_9, window_bounds = array<i64: 8, 8>}]} {
    %c0 = arith.constant 0 : index
    %c0_0 = arith.constant 0 : index
    %0 = vector.load %arg1[%c0, %c0_0] : memref<8x16xbf16, #tpu.memory_space<vmem>>, vector<8x16xbf16>
    %c0_1 = arith.constant 0 : index
    %c0_2 = arith.constant 0 : index
    %1 = vector.load %arg2[%c0_1, %c0_2] : memref<16x512xbf16, #tpu.memory_space<vmem>>, vector<16x512xbf16>
    %cst = arith.constant dense<0.000000e+00> : vector<8x512xf32>
    %2 = tpu.matmul %0, %1, %cst {dimension_numbers = #tpu.dot_dimension_numbers<[1], [0], [0], [1], [0, 0, 1, 1], [], []>} : vector<8x16xbf16>, vector<16x512xbf16>, vector<8x512xf32> -> vector<8x512xf32>
    %c0_3 = arith.constant 0 : index
    %c0_4 = arith.constant 0 : index
    %3 = vector.load %arg3[%c0_3, %c0_4] : memref<1x512xf32, #tpu.memory_space<vmem>>, vector<1x512xf32>
    %4 = vector.broadcast %3 : vector<1x512xf32> to vector<8x512xf32>
    %5 = arith.addf %2, %4 : vector<8x512xf32>
    %cst_5 = arith.constant 0.000000e+00 : f32
    %6 = vector.broadcast %cst_5 : f32 to vector<8x512xf32>
    %7 = arith.cmpf ogt, %5, %6 : vector<8x512xf32>
    %cst_6 = arith.constant 0.00999999977 : f32
    %8 = vector.broadcast %cst_6 : f32 to vector<8x512xf32>
    %9 = arith.mulf %8, %5 : vector<8x512xf32>
    %10 = arith.select %7, %5, %9 : vector<8x512xi1>, vector<8x512xf32>
    %11 = arith.truncf %10 : vector<8x512xf32> to vector<8x512xbf16>
    %c0_7 = arith.constant 0 : index
    %c0_8 = arith.constant 0 : index
    %12 = vector.load %arg4[%c0_7, %c0_8] : memref<512x512xbf16, #tpu.memory_space<vmem>>, vector<512x512xbf16>
    %cst_9 = arith.constant dense<0.000000e+00> : vector<8x512xf32>
    %13 = tpu.matmul %11, %12, %cst_9 {dimension_numbers = #tpu.dot_dimension_numbers<[1], [0], [0], [1], [0, 0, 1, 1], [], []>} : vector<8x512xbf16>, vector<512x512xbf16>, vector<8x512xf32> -> vector<8x512xf32>
    %c0_10 = arith.constant 0 : index
    %c0_11 = arith.constant 0 : index
    %14 = vector.load %arg5[%c0_10, %c0_11] : memref<1x512xf32, #tpu.memory_space<vmem>>, vector<1x512xf32>
    %15 = vector.broadcast %14 : vector<1x512xf32> to vector<8x512xf32>
    %16 = arith.addf %13, %15 : vector<8x512xf32>
    %cst_12 = arith.constant 0.000000e+00 : f32
    %17 = vector.broadcast %cst_12 : f32 to vector<8x512xf32>
    %18 = arith.cmpf ogt, %16, %17 : vector<8x512xf32>
    %cst_13 = arith.constant 0.00999999977 : f32
    %19 = vector.broadcast %cst_13 : f32 to vector<8x512xf32>
    %20 = arith.mulf %19, %16 : vector<8x512xf32>
    %21 = arith.select %18, %16, %20 : vector<8x512xi1>, vector<8x512xf32>
    %22 = arith.truncf %21 : vector<8x512xf32> to vector<8x512xbf16>
    %c0_14 = arith.constant 0 : index
    %c0_15 = arith.constant 0 : index
    %23 = vector.load %arg6[%c0_14, %c0_15] : memref<512x512xbf16, #tpu.memory_space<vmem>>, vector<512x512xbf16>
    %cst_16 = arith.constant dense<0.000000e+00> : vector<8x512xf32>
    %24 = tpu.matmul %22, %23, %cst_16 {dimension_numbers = #tpu.dot_dimension_numbers<[1], [0], [0], [1], [0, 0, 1, 1], [], []>} : vector<8x512xbf16>, vector<512x512xbf16>, vector<8x512xf32> -> vector<8x512xf32>
    %c0_17 = arith.constant 0 : index
    %c0_18 = arith.constant 0 : index
    %25 = vector.load %arg7[%c0_17, %c0_18] : memref<1x512xf32, #tpu.memory_space<vmem>>, vector<1x512xf32>
    %26 = vector.broadcast %25 : vector<1x512xf32> to vector<8x512xf32>
    %27 = arith.addf %24, %26 : vector<8x512xf32>
    %cst_19 = arith.constant 0.000000e+00 : f32
    %28 = vector.broadcast %cst_19 : f32 to vector<8x512xf32>
    %29 = arith.cmpf ogt, %27, %28 : vector<8x512xf32>
    %cst_20 = arith.constant 0.00999999977 : f32
    %30 = vector.broadcast %cst_20 : f32 to vector<8x512xf32>
    %31 = arith.mulf %30, %27 : vector<8x512xf32>
    %32 = arith.select %29, %27, %31 : vector<8x512xi1>, vector<8x512xf32>
    %33 = arith.truncf %32 : vector<8x512xf32> to vector<8x512xbf16>
    %c0_21 = arith.constant 0 : index
    %c0_22 = arith.constant 0 : index
    %34 = vector.load %arg8[%c0_21, %c0_22] : memref<512x8xbf16, #tpu.memory_space<vmem>>, vector<512x8xbf16>
    %cst_23 = arith.constant dense<0.000000e+00> : vector<8x8xf32>
    %35 = tpu.matmul %33, %34, %cst_23 {dimension_numbers = #tpu.dot_dimension_numbers<[1], [0], [0], [1], [0, 0, 1, 1], [], []>} : vector<8x512xbf16>, vector<512x8xbf16>, vector<8x8xf32> -> vector<8x8xf32>
    %c0_24 = arith.constant 0 : index
    %c0_25 = arith.constant 0 : index
    %36 = vector.load %arg9[%c0_24, %c0_25] : memref<1x8xf32, #tpu.memory_space<vmem>>, vector<1x8xf32>
    %37 = vector.broadcast %36 : vector<1x8xf32> to vector<8x8xf32>
    %38 = arith.addf %35, %37 : vector<8x8xf32>
    %c0_26 = arith.constant 0 : index
    %c0_27 = arith.constant 0 : index
    %39 = vector.load %arg10[%c0_26, %c0_27] : memref<8x8xf32, #tpu.memory_space<vmem>>, vector<8x8xf32>
    tpu.vector_store %arg10[%c0_26, %c0_27], %38 {strides = array<i32>} : memref<8x8xf32, #tpu.memory_space<vmem>>, vector<8x8xf32>,
    return
  }
  func.func @transform_0(%arg0: i32) -> (i32, i32) {
    %c0_i32 = arith.constant 0 : i32
    %c0_i32_0 = arith.constant 0 : i32
    return %arg0, %c0_i32 : i32, i32
  }
  func.func @transform_1(%arg0: i32) -> (i32, i32) {
    %c0_i32 = arith.constant 0 : i32
    %c0_i32_0 = arith.constant 0 : i32
    %c0_i32_1 = arith.constant 0 : i32
    return %c0_i32, %c0_i32_0 : i32, i32
  }
  func.func @transform_2(%arg0: i32) -> (i32, i32) {
    %c0_i32 = arith.constant 0 : i32
    %c0_i32_0 = arith.constant 0 : i32
    %c0_i32_1 = arith.constant 0 : i32
    return %c0_i32, %c0_i32_0 : i32, i32
  }
  func.func @transform_3(%arg0: i32) -> (i32, i32) {
    %c0_i32 = arith.constant 0 : i32
    %c0_i32_0 = arith.constant 0 : i32
    %c0_i32_1 = arith.constant 0 : i32
    return %c0_i32, %c0_i32_0 : i32, i32
  }
  func.func @transform_4(%arg0: i32) -> (i32, i32) {
    %c0_i32 = arith.constant 0 : i32
    %c0_i32_0 = arith.constant 0 : i32
    %c0_i32_1 = arith.constant 0 : i32
    return %c0_i32, %c0_i32_0 : i32, i32
  }
  func.func @transform_5(%arg0: i32) -> (i32, i32) {
    %c0_i32 = arith.constant 0 : i32
    %c0_i32_0 = arith.constant 0 : i32
    %c0_i32_1 = arith.constant 0 : i32
    return %c0_i32, %c0_i32_0 : i32, i32
  }
  func.func @transform_6(%arg0: i32) -> (i32, i32) {
    %c0_i32 = arith.constant 0 : i32
    %c0_i32_0 = arith.constant 0 : i32
    %c0_i32_1 = arith.constant 0 : i32
    return %c0_i32, %c0_i32_0 : i32, i32
  }
  func.func @transform_7(%arg0: i32) -> (i32, i32) {
    %c0_i32 = arith.constant 0 : i32
    %c0_i32_0 = arith.constant 0 : i32
    %c0_i32_1 = arith.constant 0 : i32
    return %c0_i32, %c0_i32_0 : i32, i32
  }
  func.func @transform_8(%arg0: i32) -> (i32, i32) {
    %c0_i32 = arith.constant 0 : i32
    %c0_i32_0 = arith.constant 0 : i32
    %c0_i32_1 = arith.constant 0 : i32
    return %c0_i32, %c0_i32_0 : i32, i32
  }
  func.func @transform_9(%arg0: i32) -> (i32, i32) {
    %c0_i32 = arith.constant 0 : i32
    %c0_i32_0 = arith.constant 0 : i32
    return %arg0, %c0_i32 : i32, i32
  }
}

</mosaic_0001>

<llo_original>
// kernel: dqn_forward.1
$region0: #{dqn_forward.1}
  #allocation0 [shape = 'u32[]', space=smem, size = 0x4, offset = 0x4, fixed_abs, tag = 'smem constant byte address 0x4 - core index']
  #allocation1 [shape = 'u32[72,128]{1,0:T(1,128)}', space=vmem, size = 0x9000, scoped, tag = 'internal scratch']
  %s0 = inlined_call_operand.vmem [shape: bf16[8,16], index: 0, kind: input, shape index: {}]
  %s1 = inlined_call_operand.vmem [shape: bf16[16,512], index: 1, kind: input, shape index: {}]
  %s2 = inlined_call_operand.vmem [shape: f32[1,512], index: 2, kind: input, shape index: {}]
  %s3 = inlined_call_operand.hbm [shape: bf16[512,512], index: 3, kind: input, shape index: {}]
  %s4 = inlined_call_operand.vmem [shape: f32[1,512], index: 4, kind: input, shape index: {}]
  %s5 = inlined_call_operand.hbm [shape: bf16[512,512], index: 5, kind: input, shape index: {}]
  %s6 = inlined_call_operand.vmem [shape: f32[1,512], index: 6, kind: input, shape index: {}]
  %s7 = inlined_call_operand.vmem [shape: bf16[512,8], index: 7, kind: input, shape index: {}]
  %s8 = inlined_call_operand.vmem [shape: f32[1,8], index: 8, kind: input, shape index: {}]
  %s9 = inlined_call_operand.vmem [shape: f32[8,8], index: 9, kind: output, shape index: {}]
  %s10 = sld [smem:[#allocation0]]
  $region54: #{dqn_forward.1} parent=0
    _
  %s12 = ssub.s32 1, %s10
  %s13 = scalar_select 0, %s12, %s10
  $region1: #{dqn_forward.1} parent=0
    #allocation2 [shape = 'u8[524288]{0}', space=vmem, size = 0x80000, scoped, tag = 'input window, operand 3, single buffered']
    #allocation3 [shape = 's32[1]{0}', space=sflag, size = 0x4, scoped, tag = 'scoped memory for dqn_forward.1']
    #allocation4 [shape = 'u8[524288]{0}', space=vmem, size = 0x80000, scoped, tag = 'input window, operand 5, single buffered']
    #allocation5 [shape = 's32[1]{0}', space=sflag, size = 0x4, scoped, tag = 'scoped memory for dqn_forward.1']
    %14 = vsyncpa [#allocation3], 0
    %15 = vsyncpa [#allocation5], 0
    // Predicated region
    $region2: #{dqn_forward.1} parent=1 // pred_check
      _
    $region3: #{dqn_forward.1} parent=1 // pred_check_branch
      %17 = sbr.rel (0) target = $region5
    $region4: #{dqn_forward.1} parent=1 // pred_region
      _
    $region5: #{dqn_forward.1} parent=1 // pred_fallthru
      _
    // Predicated region
    $region6: #{dqn_forward.1} parent=1 // pred_check
      _
    $region7: #{dqn_forward.1} parent=1 // pred_check_branch
      %19 = sbr.rel (0) target = $region9
    $region8: #{dqn_forward.1} parent=1 // pred_region
      _
    $region9: #{dqn_forward.1} parent=1 // pred_fallthru
      _
    // Predicated region
    $region10: #{dqn_forward.1} parent=1 // pred_check
      _
    $region11: #{dqn_forward.1} parent=1 // pred_check_branch
      %21 = sbr.rel (0) target = $region13
    $region12: #{dqn_forward.1} parent=1 // pred_region
      _
    $region13: #{dqn_forward.1} parent=1 // pred_fallthru
      _
    // Predicated region
    $region14: #{dqn_forward.1} parent=1 // pred_check
      _
    $region15: #{dqn_forward.1} parent=1 // pred_check_branch
      %23 = sbr.rel (0) target = $region17
    $region16: #{dqn_forward.1} parent=1 // pred_region
      %25 = vsyncadd [#allocation3], 0
      %s26 = sshll.u32 %s3, 4
      %s27 = int_to_ptr.hbm [resolvable:$true] %s26
      %s28 = sshll.u32 [#allocation2], 4
      %s29 = int_to_ptr.vmem [resolvable:$true] %s28
      %34 = dma.hbm_to_vmem [thread:$0]  %s27, 16384, %s29, [#allocation3], 256, 256, 16
    $region17: #{dqn_forward.1} parent=1 // pred_fallthru
      _
    // Predicated region
    $region18: #{dqn_forward.1} parent=1 // pred_check
      _
    $region19: #{dqn_forward.1} parent=1 // pred_check_branch
      %36 = sbr.rel (0) target = $region21
    $region20: #{dqn_forward.1} parent=1 // pred_region
      _
    $region21: #{dqn_forward.1} parent=1 // pred_fallthru
      _
    // Predicated region
    $region22: #{dqn_forward.1} parent=1 // pred_check
      _
    $region23: #{dqn_forward.1} parent=1 // pred_check_branch
      %38 = sbr.rel (0) target = $region25
    $region24: #{dqn_forward.1} parent=1 // pred_region
      %40 = vsyncadd [#allocation5], 0
      %s41 = sshll.u32 %s5, 4
      %s42 = int_to_ptr.hbm [resolvable:$true] %s41
      %s43 = sshll.u32 [#allocation4], 4
      %s44 = int_to_ptr.vmem [resolvable:$true] %s43
      %49 = dma.hbm_to_vmem [thread:$0]  %s42, 16384, %s44, [#allocation5], 256, 256, 16
    $region25: #{dqn_forward.1} parent=1 // pred_fallthru
      _
    // Predicated region
    $region26: #{dqn_forward.1} parent=1 // pred_check
      _
    $region27: #{dqn_forward.1} parent=1 // pred_check_branch
      %51 = sbr.rel (0) target = $region29
    $region28: #{dqn_forward.1} parent=1 // pred_region
      _
    $region29: #{dqn_forward.1} parent=1 // pred_fallthru
      _
    // Predicated region
    $region30: #{dqn_forward.1} parent=1 // pred_check
      _
    $region31: #{dqn_forward.1} parent=1 // pred_check_branch
      %53 = sbr.rel (0) target = $region33
    $region32: #{dqn_forward.1} parent=1 // pred_region
      _
    $region33: #{dqn_forward.1} parent=1 // pred_fallthru
      _
    // Predicated region
    $region34: #{dqn_forward.1} parent=1 // pred_check
      _
    $region35: #{dqn_forward.1} parent=1 // pred_check_branch
      %55 = sbr.rel (0) target = $region37
    $region36: #{dqn_forward.1} parent=1 // pred_region
      _
    $region37: #{dqn_forward.1} parent=1 // pred_fallthru
      _
    // Predicated region
    $region38: #{dqn_forward.1} parent=1 // pred_check
      _
    $region39: #{dqn_forward.1} parent=1 // pred_check_branch
      %57 = sbr.rel (0) target = $region41
    $region40: #{dqn_forward.1} parent=1 // pred_region
      %59 = dma.done [#allocation3], 16384
    $region41: #{dqn_forward.1} parent=1 // pred_fallthru
      _
    // Predicated region
    $region42: #{dqn_forward.1} parent=1 // pred_check
      _
    $region43: #{dqn_forward.1} parent=1 // pred_check_branch
      %61 = sbr.rel (0) target = $region45
    $region44: #{dqn_forward.1} parent=1 // pred_region
      %63 = dma.done [#allocation5], 16384
    $region45: #{dqn_forward.1} parent=1 // pred_fallthru
      _
    %v65 = vld [vmem:[%s0] sm:$0xf]
    %v66 = vld [vmem:[%s1] sm:$0xff]
    %v67 = vld [vmem:[%s1 + $0x8] sm:$0xff]
    %v68 = vld [vmem:[%s1 + $0x10] sm:$0xff]
    %v69 = vld [vmem:[%s1 + $0x18] sm:$0xff]
    %v70 = vld [vmem:[%s2] sm:$0xf]
    %v72 = vperm.slane %v70, 0
    %v73 = vperm.slane %v70, 1
    %v74 = vperm.slane %v70, 2
    %v75 = vperm.slane %v70, 3
    %v84 = vunpack.c.l.b16 %v66
    %v85 = vunpack.c.h.b16 %v66
    %v86 = vunpack.c.l.b16 %v67
    %v87 = vunpack.c.h.b16 %v67
    %v88 = vunpack.c.l.b16 %v68
    %v89 = vunpack.c.h.b16 %v68
    %v90 = vunpack.c.l.b16 %v69
    %v91 = vunpack.c.h.b16 %v69
    %v92 = vpack.c.b16 %v88, %v84
    %v93 = vpack.c.b16 %v89, %v85
    %v94 = vpack.c.b16 %v90, %v86
    %v95 = vpack.c.b16 %v91, %v87
    %vm100 = vcmask 130048
    %v102 = vsel %vm100, %v65, 0
    %104 = vmatpush.bf16.msra.mxu0 0
    %105 = vmatpush.bf16.msra.mxu0 0
    %106 = vmatpush.bf16.msra.mxu0 0
    %107 = vmatpush.bf16.msra.mxu0 0
    %108 = vmatpush.bf16.msra.mxu0 0
    %109 = vmatpush.bf16.msra.mxu0 0
    %110 = vmatpush.bf16.msra.mxu0 0
    %111 = vmatpush.bf16.msra.mxu0 %v92
    %112 = vmatmul.bf16.gmra.mxu0 %v102
    %v113 = vpop.f32.mrf.mxu0
    %v114 = vadd.f32 %v72, %v113
    %v115 = vpop.f32.mrf.mxu0
    %116 = vdwg.mxu0
    %117 = vmatpush.bf16.msra.mxu0 0
    %118 = vmatpush.bf16.msra.mxu0 0
    %119 = vmatpush.bf16.msra.mxu0 0
    %120 = vmatpush.bf16.msra.mxu0 0
    %121 = vmatpush.bf16.msra.mxu0 0
    %122 = vmatpush.bf16.msra.mxu0 0
    %123 = vmatpush.bf16.msra.mxu0 0
    %124 = vmatpush.bf16.msra.mxu0 %v93
    %125 = vmatmul.bf16.gmra.mxu0 %v102
    %v126 = vpop.f32.mrf.mxu0
    %v127 = vadd.f32 %v73, %v126
    %v128 = vpop.f32.mrf.mxu0
    %129 = vdwg.mxu0
    %130 = vmatpush.bf16.msra.mxu0 0
    %131 = vmatpush.bf16.msra.mxu0 0
    %132 = vmatpush.bf16.msra.mxu0 0
    %133 = vmatpush.bf16.msra.mxu0 0
    %134 = vmatpush.bf16.msra.mxu0 0
    %135 = vmatpush.bf16.msra.mxu0 0
    %136 = vmatpush.bf16.msra.mxu0 0
    %137 = vmatpush.bf16.msra.mxu0 %v94
    %138 = vmatmul.bf16.gmra.mxu0 %v102
    %v139 = vpop.f32.mrf.mxu0
    %v140 = vadd.f32 %v74, %v139
    %v141 = vpop.f32.mrf.mxu0
    %142 = vdwg.mxu0
    %143 = vmatpush.bf16.msra.mxu0 0
    %144 = vmatpush.bf16.msra.mxu0 0
    %145 = vmatpush.bf16.msra.mxu0 0
    %146 = vmatpush.bf16.msra.mxu0 0
    %147 = vmatpush.bf16.msra.mxu0 0
    %148 = vmatpush.bf16.msra.mxu0 0
    %149 = vmatpush.bf16.msra.mxu0 0
    %150 = vmatpush.bf16.msra.mxu0 %v95
    %151 = vmatmul.bf16.gmra.mxu0 %v102
    %v152 = vpop.f32.mrf.mxu0
    %v153 = vadd.f32 %v75, %v152
    %v154 = vpop.f32.mrf.mxu0
    %155 = vdwg.mxu0
    %vm156 = vcmp.gt.f32.partialorder %v114, 0.0
    %vm157 = vcmp.gt.f32.partialorder %v127, 0.0
    %vm158 = vcmp.gt.f32.partialorder %v140, 0.0
    %vm159 = vcmp.gt.f32.partialorder %v153, 0.0
    %v160 = vmul.f32 %v114, 0.01
    %v161 = vmul.f32 %v127, 0.01
    %v162 = vmul.f32 %v140, 0.01
    %v163 = vmul.f32 %v153, 0.01
    %v164 = vsel %vm156, %v114, %v160
    %v165 = vsel %vm157, %v127, %v161
    %v166 = vsel %vm158, %v140, %v162
    %v167 = vsel %vm159, %v153, %v163
    %v168 = vpack.c.bf16 %v164, %v164
    %v169 = vpack.c.bf16 %v165, %v165
    %v170 = vpack.c.bf16 %v166, %v166
    %v171 = vpack.c.bf16 %v167, %v167
    %v172 = vld [vmem:[#allocation2] sm:$0xff]
    %v173 = vld [vmem:[#allocation2 + $0x8] sm:$0xff]
    %v174 = vld [vmem:[#allocation2 + $0x10] sm:$0xff]
    %v175 = vld [vmem:[#allocation2 + $0x18] sm:$0xff]
    %v176 = vld [vmem:[#allocation2 + $0x20] sm:$0xff]
    %v177 = vld [vmem:[#allocation2 + $0x28] sm:$0xff]
    %v178 = vld [vmem:[#allocation2 + $0x30] sm:$0xff]
    %v179 = vld [vmem:[#allocation2 + $0x38] sm:$0xff]
    %v180 = vld [vmem:[#allocation2 + $0x40] sm:$0xff]
    %v181 = vld [vmem:[#allocation2 + $0x48] sm:$0xff]
    %v182 = vld [vmem:[#allocation2 + $0x50] sm:$0xff]
    %v183 = vld [vmem:[#allocation2 + $0x58] sm:$0xff]
    %v184 = vld [vmem:[#allocation2 + $0x60] sm:$0xff]
    %v185 = vld [vmem:[#allocation2 + $0x68] sm:$0xff]
    %v186 = vld [vmem:[#allocation2 + $0x70] sm:$0xff]
    %v187 = vld [vmem:[#allocation2 + $0x78] sm:$0xff]
    %v188 = vld [vmem:[#allocation2 + $0x80] sm:$0xff]
    %v189 = vld [vmem:[#allocation2 + $0x88] sm:$0xff]
    %v190 = vld [vmem:[#allocation2 + $0x90] sm:$0xff]
    %v191 = vld [vmem:[#allocation2 + $0x98] sm:$0xff]
    %v192 = vld [vmem:[#allocation2 + $0xa0] sm:$0xff]
    %v193 = vld [vmem:[#allocation2 + $0xa8] sm:$0xff]
    %v194 = vld [vmem:[#allocation2 + $0xb0] sm:$0xff]
    %v195 = vld [vmem:[#allocation2 + $0xb8] sm:$0xff]
    %v196 = vld [vmem:[#allocation2 + $0xc0] sm:$0xff]
    %v197 = vld [vmem:[#allocation2 + $0xc8] sm:$0xff]
    %v198 = vld [vmem:[#allocation2 + $0xd0] sm:$0xff]
    %v199 = vld [vmem:[#allocation2 + $0xd8] sm:$0xff]
    %v200 = vld [vmem:[#allocation2 + $0xe0] sm:$0xff]
    %v201 = vld [vmem:[#allocation2 + $0xe8] sm:$0xff]
    %v202 = vld [vmem:[#allocation2 + $0xf0] sm:$0xff]
    %v203 = vld [vmem:[#allocation2 + $0xf8] sm:$0xff]
    %v204 = vld [vmem:[#allocation2 + $0x100] sm:$0xff]
    %v205 = vld [vmem:[#allocation2 + $0x108] sm:$0xff]
    %v206 = vld [vmem:[#allocation2 + $0x110] sm:$0xff]
    %v207 = vld [vmem:[#allocation2 + $0x118] sm:$0xff]
    %v208 = vld [vmem:[#allocation2 + $0x120] sm:$0xff]
    %v209 = vld [vmem:[#allocation2 + $0x128] sm:$0xff]
    %v210 = vld [vmem:[#allocation2 + $0x130] sm:$0xff]
    %v211 = vld [vmem:[#allocation2 + $0x138] sm:$0xff]
    %v212 = vld [vmem:[#allocation2 + $0x140] sm:$0xff]
    %v213 = vld [vmem:[#allocation2 + $0x148] sm:$0xff]
    %v214 = vld [vmem:[#allocation2 + $0x150] sm:$0xff]
    %v215 = vld [vmem:[#allocation2 + $0x158] sm:$0xff]
    %v216 = vld [vmem:[#allocation2 + $0x160] sm:$0xff]
    %v217 = vld [vmem:[#allocation2 + $0x168] sm:$0xff]
    %v218 = vld [vmem:[#allocation2 + $0x170] sm:$0xff]
    %v219 = vld [vmem:[#allocation2 + $0x178] sm:$0xff]
    %v220 = vld [vmem:[#allocation2 + $0x180] sm:$0xff]
    %v221 = vld [vmem:[#allocation2 + $0x188] sm:$0xff]
    %v222 = vld [vmem:[#allocation2 + $0x190] sm:$0xff]
    %v223 = vld [vmem:[#allocation2 + $0x198] sm:$0xff]
    %v224 = vld [vmem:[#allocation2 + $0x1a0] sm:$0xff]
    %v225 = vld [vmem:[#allocation2 + $0x1a8] sm:$0xff]
    %v226 = vld [vmem:[#allocation2 + $0x1b0] sm:$0xff]
    %v227 = vld [vmem:[#allocation2 + $0x1b8] sm:$0xff]
    %v228 = vld [vmem:[#allocation2 + $0x1c0] sm:$0xff]
    %v229 = vld [vmem:[#allocation2 + $0x1c8] sm:$0xff]
    %v230 = vld [vmem:[#allocation2 + $0x1d0] sm:$0xff]
    %v231 = vld [vmem:[#allocation2 + $0x1d8] sm:$0xff]
    %v232 = vld [vmem:[#allocation2 + $0x1e0] sm:$0xff]
    %v233 = vld [vmem:[#allocation2 + $0x1e8] sm:$0xff]
    %v234 = vld [vmem:[#allocation2 + $0x1f0] sm:$0xff]
    %v235 = vld [vmem:[#allocation2 + $0x1f8] sm:$0xff]
    %v236 = vld [vmem:[#allocation2 + $0x200] sm:$0xff]
    %v237 = vld [vmem:[#allocation2 + $0x208] sm:$0xff]
    %v238 = vld [vmem:[#allocation2 + $0x210] sm:$0xff]
    %v239 = vld [vmem:[#allocation2 + $0x218] sm:$0xff]
    %v240 = vld [vmem:[#allocation2 + $0x220] sm:$0xff]
    %v241 = vld [vmem:[#allocation2 + $0x228] sm:$0xff]
    %v242 = vld [vmem:[#allocation2 + $0x230] sm:$0xff]
    %v243 = vld [vmem:[#allocation2 + $0x238] sm:$0xff]
    %v244 = vld [vmem:[#allocation2 + $0x240] sm:$0xff]
    %v245 = vld [vmem:[#allocation2 + $0x248] sm:$0xff]
    %v246 = vld [vmem:[#allocation2 + $0x250] sm:$0xff]
    %v247 = vld [vmem:[#allocation2 + $0x258] sm:$0xff]
    %v248 = vld [vmem:[#allocation2 + $0x260] sm:$0xff]
    %v249 = vld [vmem:[#allocation2 + $0x268] sm:$0xff]
    %v250 = vld [vmem:[#allocation2 + $0x270] sm:$0xff]
    %v251 = vld [vmem:[#allocation2 + $0x278] sm:$0xff]
    %v252 = vld [vmem:[#allocation2 + $0x280] sm:$0xff]
    %v253 = vld [vmem:[#allocation2 + $0x288] sm:$0xff]
    %v254 = vld [vmem:[#allocation2 + $0x290] sm:$0xff]
    %v255 = vld [vmem:[#allocation2 + $0x298] sm:$0xff]
    %v256 = vld [vmem:[#allocation2 + $0x2a0] sm:$0xff]
    %v257 = vld [vmem:[#allocation2 + $0x2a8] sm:$0xff]
    %v258 = vld [vmem:[#allocation2 + $0x2b0] sm:$0xff]
    %v259 = vld [vmem:[#allocation2 + $0x2b8] sm:$0xff]
    %v260 = vld [vmem:[#allocation2 + $0x2c0] sm:$0xff]
    %v261 = vld [vmem:[#allocation2 + $0x2c8] sm:$0xff]
    %v262 = vld [vmem:[#allocation2 + $0x2d0] sm:$0xff]
    %v263 = vld [vmem:[#allocation2 + $0x2d8] sm:$0xff]
    %v264 = vld [vmem:[#allocation2 + $0x2e0] sm:$0xff]
    %v265 = vld [vmem:[#allocation2 + $0x2e8] sm:$0xff]
    %v266 = vld [vmem:[#allocation2 + $0x2f0] sm:$0xff]
    %v267 = vld [vmem:[#allocation2 + $0x2f8] sm:$0xff]
    %v268 = vld [vmem:[#allocation2 + $0x300] sm:$0xff]
    %v269 = vld [vmem:[#allocation2 + $0x308] sm:$0xff]
    %v270 = vld [vmem:[#allocation2 + $0x310] sm:$0xff]
    %v271 = vld [vmem:[#allocation2 + $0x318] sm:$0xff]
    %v272 = vld [vmem:[#allocation2 + $0x320] sm:$0xff]
    %v273 = vld [vmem:[#allocation2 + $0x328] sm:$0xff]
    %v274 = vld [vmem:[#allocation2 + $0x330] sm:$0xff]
    %v275 = vld [vmem:[#allocation2 + $0x338] sm:$0xff]
    %v276 = vld [vmem:[#allocation2 + $0x340] sm:$0xff]
    %v277 = vld [vmem:[#allocation2 + $0x348] sm:$0xff]
    %v278 = vld [vmem:[#allocation2 + $0x350] sm:$0xff]
    %v279 = vld [vmem:[#allocation2 + $0x358] sm:$0xff]
    %v280 = vld [vmem:[#allocation2 + $0x360] sm:$0xff]
    %v281 = vld [vmem:[#allocation2 + $0x368] sm:$0xff]
    %v282 = vld [vmem:[#allocation2 + $0x370] sm:$0xff]
    %v283 = vld [vmem:[#allocation2 + $0x378] sm:$0xff]
    %v284 = vld [vmem:[#allocation2 + $0x380] sm:$0xff]
    %v285 = vld [vmem:[#allocation2 + $0x388] sm:$0xff]
    %v286 = vld [vmem:[#allocation2 + $0x390] sm:$0xff]
    %v287 = vld [vmem:[#allocation2 + $0x398] sm:$0xff]
    %v288 = vld [vmem:[#allocation2 + $0x3a0] sm:$0xff]
    %v289 = vld [vmem:[#allocation2 + $0x3a8] sm:$0xff]
    %v290 = vld [vmem:[#allocation2 + $0x3b0] sm:$0xff]
    %v291 = vld [vmem:[#allocation2 + $0x3b8] sm:$0xff]
    %v292 = vld [vmem:[#allocation2 + $0x3c0] sm:$0xff]
    %v293 = vld [vmem:[#allocation2 + $0x3c8] sm:$0xff]
    %v294 = vld [vmem:[#allocation2 + $0x3d0] sm:$0xff]
    %v295 = vld [vmem:[#allocation2 + $0x3d8] sm:$0xff]
    %v296 = vld [vmem:[#allocation2 + $0x3e0] sm:$0xff]
    %v297 = vld [vmem:[#allocation2 + $0x3e8] sm:$0xff]
    %v298 = vld [vmem:[#allocation2 + $0x3f0] sm:$0xff]
    %v299 = vld [vmem:[#allocation2 + $0x3f8] sm:$0xff]
    %v300 = vld [vmem:[%s4] sm:$0xf]
    %v302 = vperm.slane %v300, 0
    %v303 = vperm.slane %v300, 1
    %v304 = vperm.slane %v300, 2
    %v305 = vperm.slane %v300, 3
    %v438 = vunpack.c.l.b16 %v172
    %v439 = vunpack.c.h.b16 %v172
    %v440 = vunpack.c.l.b16 %v173
    %v441 = vunpack.c.h.b16 %v173
    %v442 = vunpack.c.l.b16 %v174
    %v443 = vunpack.c.h.b16 %v174
    %v444 = vunpack.c.l.b16 %v175
    %v445 = vunpack.c.h.b16 %v175
    %v446 = vunpack.c.l.b16 %v176
    %v447 = vunpack.c.h.b16 %v176
    %v448 = vunpack.c.l.b16 %v177
    %v449 = vunpack.c.h.b16 %v177
    %v450 = vunpack.c.l.b16 %v178
    %v451 = vunpack.c.h.b16 %v178
    %v452 = vunpack.c.l.b16 %v179
    %v453 = vunpack.c.h.b16 %v179
    %v454 = vunpack.c.l.b16 %v180
    %v455 = vunpack.c.h.b16 %v180
    %v456 = vunpack.c.l.b16 %v181
    %v457 = vunpack.c.h.b16 %v181
    %v458 = vunpack.c.l.b16 %v182
    %v459 = vunpack.c.h.b16 %v182
    %v460 = vunpack.c.l.b16 %v183
    %v461 = vunpack.c.h.b16 %v183
    %v462 = vunpack.c.l.b16 %v184
    %v463 = vunpack.c.h.b16 %v184
    %v464 = vunpack.c.l.b16 %v185
    %v465 = vunpack.c.h.b16 %v185
    %v466 = vunpack.c.l.b16 %v186
    %v467 = vunpack.c.h.b16 %v186
    %v468 = vunpack.c.l.b16 %v187
    %v469 = vunpack.c.h.b16 %v187
    %v470 = vunpack.c.l.b16 %v188
    %v471 = vunpack.c.h.b16 %v188
    %v472 = vunpack.c.l.b16 %v189
    %v473 = vunpack.c.h.b16 %v189
    %v474 = vunpack.c.l.b16 %v190
    %v475 = vunpack.c.h.b16 %v190
    %v476 = vunpack.c.l.b16 %v191
    %v477 = vunpack.c.h.b16 %v191
    %v478 = vunpack.c.l.b16 %v192
    %v479 = vunpack.c.h.b16 %v192
    %v480 = vunpack.c.l.b16 %v193
    %v481 = vunpack.c.h.b16 %v193
    %v482 = vunpack.c.l.b16 %v194
    %v483 = vunpack.c.h.b16 %v194
    %v484 = vunpack.c.l.b16 %v195
    %v485 = vunpack.c.h.b16 %v195
    %v486 = vunpack.c.l.b16 %v196
    %v487 = vunpack.c.h.b16 %v196
    %v488 = vunpack.c.l.b16 %v197
    %v489 = vunpack.c.h.b16 %v197
    %v490 = vunpack.c.l.b16 %v198
    %v491 = vunpack.c.h.b16 %v198
    %v492 = vunpack.c.l.b16 %v199
    %v493 = vunpack.c.h.b16 %v199
    %v494 = vunpack.c.l.b16 %v200
    %v495 = vunpack.c.h.b16 %v200
    %v496 = vunpack.c.l.b16 %v201
    %v497 = vunpack.c.h.b16 %v201
    %v498 = vunpack.c.l.b16 %v202
    %v499 = vunpack.c.h.b16 %v202
    %v500 = vunpack.c.l.b16 %v203
    %v501 = vunpack.c.h.b16 %v203
    %v502 = vunpack.c.l.b16 %v204
    %v503 = vunpack.c.h.b16 %v204
    %v504 = vunpack.c.l.b16 %v205
    %v505 = vunpack.c.h.b16 %v205
    %v506 = vunpack.c.l.b16 %v206
    %v507 = vunpack.c.h.b16 %v206
    %v508 = vunpack.c.l.b16 %v207
    %v509 = vunpack.c.h.b16 %v207
    %v510 = vunpack.c.l.b16 %v208
    %v511 = vunpack.c.h.b16 %v208
    %v512 = vunpack.c.l.b16 %v209
    %v513 = vunpack.c.h.b16 %v209
    %v514 = vunpack.c.l.b16 %v210
    %v515 = vunpack.c.h.b16 %v210
    %v516 = vunpack.c.l.b16 %v211
    %v517 = vunpack.c.h.b16 %v211
    %v518 = vunpack.c.l.b16 %v212
    %v519 = vunpack.c.h.b16 %v212
    %v520 = vunpack.c.l.b16 %v213
    %v521 = vunpack.c.h.b16 %v213
    %v522 = vunpack.c.l.b16 %v214
    %v523 = vunpack.c.h.b16 %v214
    %v524 = vunpack.c.l.b16 %v215
    %v525 = vunpack.c.h.b16 %v215
    %v526 = vunpack.c.l.b16 %v216
    %v527 = vunpack.c.h.b16 %v216
    %v528 = vunpack.c.l.b16 %v217
    %v529 = vunpack.c.h.b16 %v217
    %v530 = vunpack.c.l.b16 %v218
    %v531 = vunpack.c.h.b16 %v218
    %v532 = vunpack.c.l.b16 %v219
    %v533 = vunpack.c.h.b16 %v219
    %v534 = vunpack.c.l.b16 %v220
    %v535 = vunpack.c.h.b16 %v220
    %v536 = vunpack.c.l.b16 %v221
    %v537 = vunpack.c.h.b16 %v221
    %v538 = vunpack.c.l.b16 %v222
    %v539 = vunpack.c.h.b16 %v222
    %v540 = vunpack.c.l.b16 %v223
    %v541 = vunpack.c.h.b16 %v223
    %v542 = vunpack.c.l.b16 %v224
    %v543 = vunpack.c.h.b16 %v224
    %v544 = vunpack.c.l.b16 %v225
    %v545 = vunpack.c.h.b16 %v225
    %v546 = vunpack.c.l.b16 %v226
    %v547 = vunpack.c.h.b16 %v226
    %v548 = vunpack.c.l.b16 %v227
    %v549 = vunpack.c.h.b16 %v227
    %v550 = vunpack.c.l.b16 %v228
    %v551 = vunpack.c.h.b16 %v228
    %v552 = vunpack.c.l.b16 %v229
    %v553 = vunpack.c.h.b16 %v229
    %v554 = vunpack.c.l.b16 %v230
    %v555 = vunpack.c.h.b16 %v230
    %v556 = vunpack.c.l.b16 %v231
    %v557 = vunpack.c.h.b16 %v231
    %v558 = vunpack.c.l.b16 %v232
    %v559 = vunpack.c.h.b16 %v232
    %v560 = vunpack.c.l.b16 %v233
    %v561 = vunpack.c.h.b16 %v233
    %v562 = vunpack.c.l.b16 %v234
    %v563 = vunpack.c.h.b16 %v234
    %v564 = vunpack.c.l.b16 %v235
    %v565 = vunpack.c.h.b16 %v235
    %v566 = vunpack.c.l.b16 %v236
    %v567 = vunpack.c.h.b16 %v236
    %v568 = vunpack.c.l.b16 %v237
    %v569 = vunpack.c.h.b16 %v237
    %v570 = vunpack.c.l.b16 %v238
    %v571 = vunpack.c.h.b16 %v238
    %v572 = vunpack.c.l.b16 %v239
    %v573 = vunpack.c.h.b16 %v239
    %v574 = vunpack.c.l.b16 %v240
    %v575 = vunpack.c.h.b16 %v240
    %v576 = vunpack.c.l.b16 %v241
    %v577 = vunpack.c.h.b16 %v241
    %v578 = vunpack.c.l.b16 %v242
    %v579 = vunpack.c.h.b16 %v242
    %v580 = vunpack.c.l.b16 %v243
    %v581 = vunpack.c.h.b16 %v243
    %v582 = vunpack.c.l.b16 %v244
    %v583 = vunpack.c.h.b16 %v244
    %v584 = vunpack.c.l.b16 %v245
    %v585 = vunpack.c.h.b16 %v245
    %v586 = vunpack.c.l.b16 %v246
    %v587 = vunpack.c.h.b16 %v246
    %v588 = vunpack.c.l.b16 %v247
    %v589 = vunpack.c.h.b16 %v247
    %v590 = vunpack.c.l.b16 %v248
    %v591 = vunpack.c.h.b16 %v248
    %v592 = vunpack.c.l.b16 %v249
    %v593 = vunpack.c.h.b16 %v249
    %v594 = vunpack.c.l.b16 %v250
    %v595 = vunpack.c.h.b16 %v250
    %v596 = vunpack.c.l.b16 %v251
    %v597 = vunpack.c.h.b16 %v251
    %v598 = vunpack.c.l.b16 %v252
    %v599 = vunpack.c.h.b16 %v252
    %v600 = vunpack.c.l.b16 %v253
    %v601 = vunpack.c.h.b16 %v253
    %v602 = vunpack.c.l.b16 %v254
    %v603 = vunpack.c.h.b16 %v254
    %v604 = vunpack.c.l.b16 %v255
    %v605 = vunpack.c.h.b16 %v255
    %v606 = vunpack.c.l.b16 %v256
    %v607 = vunpack.c.h.b16 %v256
    %v608 = vunpack.c.l.b16 %v257
    %v609 = vunpack.c.h.b16 %v257
    %v610 = vunpack.c.l.b16 %v258
    %v611 = vunpack.c.h.b16 %v258
    %v612 = vunpack.c.l.b16 %v259
    %v613 = vunpack.c.h.b16 %v259
    %v614 = vunpack.c.l.b16 %v260
    %v615 = vunpack.c.h.b16 %v260
    %v616 = vunpack.c.l.b16 %v261
    %v617 = vunpack.c.h.b16 %v261
    %v618 = vunpack.c.l.b16 %v262
    %v619 = vunpack.c.h.b16 %v262
    %v620 = vunpack.c.l.b16 %v263
    %v621 = vunpack.c.h.b16 %v263
    %v622 = vunpack.c.l.b16 %v264
    %v623 = vunpack.c.h.b16 %v264
    %v624 = vunpack.c.l.b16 %v265
    %v625 = vunpack.c.h.b16 %v265
    %v626 = vunpack.c.l.b16 %v266
    %v627 = vunpack.c.h.b16 %v266
    %v628 = vunpack.c.l.b16 %v267
    %v629 = vunpack.c.h.b16 %v267
    %v630 = vunpack.c.l.b16 %v268
    %v631 = vunpack.c.h.b16 %v268
    %v632 = vunpack.c.l.b16 %v269
    %v633 = vunpack.c.h.b16 %v269
    %v634 = vunpack.c.l.b16 %v270
    %v635 = vunpack.c.h.b16 %v270
    %v636 = vunpack.c.l.b16 %v271
    %v637 = vunpack.c.h.b16 %v271
    %v638 = vunpack.c.l.b16 %v272
    %v639 = vunpack.c.h.b16 %v272
    %v640 = vunpack.c.l.b16 %v273
    %v641 = vunpack.c.h.b16 %v273
    %v642 = vunpack.c.l.b16 %v274
    %v643 = vunpack.c.h.b16 %v274
    %v644 = vunpack.c.l.b16 %v275
    %v645 = vunpack.c.h.b16 %v275
    %v646 = vunpack.c.l.b16 %v276
    %v647 = vunpack.c.h.b16 %v276
    %v648 = vunpack.c.l.b16 %v277
    %v649 = vunpack.c.h.b16 %v277
    %v650 = vunpack.c.l.b16 %v278
    %v651 = vunpack.c.h.b16 %v278
    %v652 = vunpack.c.l.b16 %v279
    %v653 = vunpack.c.h.b16 %v279
    %v654 = vunpack.c.l.b16 %v280
    %v655 = vunpack.c.h.b16 %v280
    %v656 = vunpack.c.l.b16 %v281
    %v657 = vunpack.c.h.b16 %v281
    %v658 = vunpack.c.l.b16 %v282
    %v659 = vunpack.c.h.b16 %v282
    %v660 = vunpack.c.l.b16 %v283
    %v661 = vunpack.c.h.b16 %v283
    %v662 = vunpack.c.l.b16 %v284
    %v663 = vunpack.c.h.b16 %v284
    %v664 = vunpack.c.l.b16 %v285
    %v665 = vunpack.c.h.b16 %v285
    %v666 = vunpack.c.l.b16 %v286
    %v667 = vunpack.c.h.b16 %v286
    %v668 = vunpack.c.l.b16 %v287
    %v669 = vunpack.c.h.b16 %v287
    %v670 = vunpack.c.l.b16 %v288
    %v671 = vunpack.c.h.b16 %v288
    %v672 = vunpack.c.l.b16 %v289
    %v673 = vunpack.c.h.b16 %v289
    %v674 = vunpack.c.l.b16 %v290
    %v675 = vunpack.c.h.b16 %v290
    %v676 = vunpack.c.l.b16 %v291
    %v677 = vunpack.c.h.b16 %v291
    %v678 = vunpack.c.l.b16 %v292
    %v679 = vunpack.c.h.b16 %v292
    %v680 = vunpack.c.l.b16 %v293
    %v681 = vunpack.c.h.b16 %v293
    %v682 = vunpack.c.l.b16 %v294
    %v683 = vunpack.c.h.b16 %v294
    %v684 = vunpack.c.l.b16 %v295
    %v685 = vunpack.c.h.b16 %v295
    %v686 = vunpack.c.l.b16 %v296
    %v687 = vunpack.c.h.b16 %v296
    %v688 = vunpack.c.l.b16 %v297
    %v689 = vunpack.c.h.b16 %v297
    %v690 = vunpack.c.l.b16 %v298
    %v691 = vunpack.c.h.b16 %v298
    %v692 = vunpack.c.l.b16 %v299
    %v693 = vunpack.c.h.b16 %v299
    %v694 = vpack.c.b16 %v442, %v438
    %v695 = vpack.c.b16 %v443, %v439
    %v696 = vpack.c.b16 %v444, %v440
    %v697 = vpack.c.b16 %v445, %v441
    %v698 = vpack.c.b16 %v450, %v446
    %v699 = vpack.c.b16 %v451, %v447
    %v700 = vpack.c.b16 %v452, %v448
    %v701 = vpack.c.b16 %v453, %v449
    %v702 = vpack.c.b16 %v458, %v454
    %v703 = vpack.c.b16 %v459, %v455
    %v704 = vpack.c.b16 %v460, %v456
    %v705 = vpack.c.b16 %v461, %v457
    %v706 = vpack.c.b16 %v466, %v462
    %v707 = vpack.c.b16 %v467, %v463
    %v708 = vpack.c.b16 %v468, %v464
    %v709 = vpack.c.b16 %v469, %v465
    %v710 = vpack.c.b16 %v474, %v470
    %v711 = vpack.c.b16 %v475, %v471
    %v712 = vpack.c.b16 %v476, %v472
    %v713 = vpack.c.b16 %v477, %v473
    %v714 = vpack.c.b16 %v482, %v478
    %v715 = vpack.c.b16 %v483, %v479
    %v716 = vpack.c.b16 %v484, %v480
    %v717 = vpack.c.b16 %v485, %v481
    %v718 = vpack.c.b16 %v490, %v486
    %v719 = vpack.c.b16 %v491, %v487
    %v720 = vpack.c.b16 %v492, %v488
    %v721 = vpack.c.b16 %v493, %v489
    %v722 = vpack.c.b16 %v498, %v494
    %v723 = vpack.c.b16 %v499, %v495
    %v724 = vpack.c.b16 %v500, %v496
    %v725 = vpack.c.b16 %v501, %v497
    %v726 = vpack.c.b16 %v506, %v502
    %v727 = vpack.c.b16 %v507, %v503
    %v728 = vpack.c.b16 %v508, %v504
    %v729 = vpack.c.b16 %v509, %v505
    %v730 = vpack.c.b16 %v514, %v510
    %v731 = vpack.c.b16 %v515, %v511
    %v732 = vpack.c.b16 %v516, %v512
    %v733 = vpack.c.b16 %v517, %v513
    %v734 = vpack.c.b16 %v522, %v518
    %v735 = vpack.c.b16 %v523, %v519
    %v736 = vpack.c.b16 %v524, %v520
    %v737 = vpack.c.b16 %v525, %v521
    %v738 = vpack.c.b16 %v530, %v526
    %v739 = vpack.c.b16 %v531, %v527
    %v740 = vpack.c.b16 %v532, %v528
    %v741 = vpack.c.b16 %v533, %v529
    %v742 = vpack.c.b16 %v538, %v534
    %v743 = vpack.c.b16 %v539, %v535
    %v744 = vpack.c.b16 %v540, %v536
    %v745 = vpack.c.b16 %v541, %v537
    %v746 = vpack.c.b16 %v546, %v542
    %v747 = vpack.c.b16 %v547, %v543
    %v748 = vpack.c.b16 %v548, %v544
    %v749 = vpack.c.b16 %v549, %v545
    %v750 = vpack.c.b16 %v554, %v550
    %v751 = vpack.c.b16 %v555, %v551
    %v752 = vpack.c.b16 %v556, %v552
    %v753 = vpack.c.b16 %v557, %v553
    %v754 = vpack.c.b16 %v562, %v558
    %v755 = vpack.c.b16 %v563, %v559
    %v756 = vpack.c.b16 %v564, %v560
    %v757 = vpack.c.b16 %v565, %v561
    %v758 = vpack.c.b16 %v570, %v566
    %v759 = vpack.c.b16 %v571, %v567
    %v760 = vpack.c.b16 %v572, %v568
    %v761 = vpack.c.b16 %v573, %v569
    %v762 = vpack.c.b16 %v578, %v574
    %v763 = vpack.c.b16 %v579, %v575
    %v764 = vpack.c.b16 %v580, %v576
    %v765 = vpack.c.b16 %v581, %v577
    %v766 = vpack.c.b16 %v586, %v582
    %v767 = vpack.c.b16 %v587, %v583
    %v768 = vpack.c.b16 %v588, %v584
    %v769 = vpack.c.b16 %v589, %v585
    %v770 = vpack.c.b16 %v594, %v590
    %v771 = vpack.c.b16 %v595, %v591
    %v772 = vpack.c.b16 %v596, %v592
    %v773 = vpack.c.b16 %v597, %v593
    %v774 = vpack.c.b16 %v602, %v598
    %v775 = vpack.c.b16 %v603, %v599
    %v776 = vpack.c.b16 %v604, %v600
    %v777 = vpack.c.b16 %v605, %v601
    %v778 = vpack.c.b16 %v610, %v606
    %v779 = vpack.c.b16 %v611, %v607
    %v780 = vpack.c.b16 %v612, %v608
    %v781 = vpack.c.b16 %v613, %v609
    %v782 = vpack.c.b16 %v618, %v614
    %v783 = vpack.c.b16 %v619, %v615
    %v784 = vpack.c.b16 %v620, %v616
    %v785 = vpack.c.b16 %v621, %v617
    %v786 = vpack.c.b16 %v626, %v622
    %v787 = vpack.c.b16 %v627, %v623
    %v788 = vpack.c.b16 %v628, %v624
    %v789 = vpack.c.b16 %v629, %v625
    %v790 = vpack.c.b16 %v634, %v630
    %v791 = vpack.c.b16 %v635, %v631
    %v792 = vpack.c.b16 %v636, %v632
    %v793 = vpack.c.b16 %v637, %v633
    %v794 = vpack.c.b16 %v642, %v638
    %v795 = vpack.c.b16 %v643, %v639
    %v796 = vpack.c.b16 %v644, %v640
    %v797 = vpack.c.b16 %v645, %v641
    %v798 = vpack.c.b16 %v650, %v646
    %v799 = vpack.c.b16 %v651, %v647
    %v800 = vpack.c.b16 %v652, %v648
    %v801 = vpack.c.b16 %v653, %v649
    %v802 = vpack.c.b16 %v658, %v654
    %v803 = vpack.c.b16 %v659, %v655
    %v804 = vpack.c.b16 %v660, %v656
    %v805 = vpack.c.b16 %v661, %v657
    %v806 = vpack.c.b16 %v666, %v662
    %v807 = vpack.c.b16 %v667, %v663
    %v808 = vpack.c.b16 %v668, %v664
    %v809 = vpack.c.b16 %v669, %v665
    %v810 = vpack.c.b16 %v674, %v670
    %v811 = vpack.c.b16 %v675, %v671
    %v812 = vpack.c.b16 %v676, %v672
    %v813 = vpack.c.b16 %v677, %v673
    %v814 = vpack.c.b16 %v682, %v678
    %v815 = vpack.c.b16 %v683, %v679
    %v816 = vpack.c.b16 %v684, %v680
    %v817 = vpack.c.b16 %v685, %v681
    %v818 = vpack.c.b16 %v690, %v686
    %v819 = vpack.c.b16 %v691, %v687
    %v820 = vpack.c.b16 %v692, %v688
    %v821 = vpack.c.b16 %v693, %v689
    %950 = vmatpush.bf16.msra.mxu0 %v722
    %951 = vmatpush.bf16.msra.mxu0 %v718
    %952 = vmatpush.bf16.msra.mxu0 %v714
    %953 = vmatpush.bf16.msra.mxu0 %v710
    %954 = vmatpush.bf16.msra.mxu0 %v706
    %955 = vmatpush.bf16.msra.mxu0 %v702
    %956 = vmatpush.bf16.msra.mxu0 %v698
    %957 = vmatpush.bf16.msra.mxu0 %v694
    %958 = vmatmul.bf16.gmra.mxu0 %v168
    %v959 = vpop.f32.mrf.mxu0
    %v960 = vadd.f32 %v302, %v959
    %v961 = vpop.f32.mrf.mxu0
    %962 = vdwg.mxu0
    %963 = vmatpush.bf16.msra.mxu0 %v754
    %964 = vmatpush.bf16.msra.mxu0 %v750
    %965 = vmatpush.bf16.msra.mxu0 %v746
    %966 = vmatpush.bf16.msra.mxu0 %v742
    %967 = vmatpush.bf16.msra.mxu0 %v738
    %968 = vmatpush.bf16.msra.mxu0 %v734
    %969 = vmatpush.bf16.msra.mxu0 %v730
    %970 = vmatpush.bf16.msra.mxu0 %v726
    %971 = vmatmul.bf16.gmra.mxu0 %v169
    %v972 = vpop.f32.mrf.mxu0
    %v973 = vadd.f32 %v960, %v972
    %v974 = vpop.f32.mrf.mxu0
    %975 = vdwg.mxu0
    %976 = vmatpush.bf16.msra.mxu0 %v786
    %977 = vmatpush.bf16.msra.mxu0 %v782
    %978 = vmatpush.bf16.msra.mxu0 %v778
    %979 = vmatpush.bf16.msra.mxu0 %v774
    %980 = vmatpush.bf16.msra.mxu0 %v770
    %981 = vmatpush.bf16.msra.mxu0 %v766
    %982 = vmatpush.bf16.msra.mxu0 %v762
    %983 = vmatpush.bf16.msra.mxu0 %v758
    %984 = vmatmul.bf16.gmra.mxu0 %v170
    %v985 = vpop.f32.mrf.mxu0
    %v986 = vadd.f32 %v973, %v985
    %v987 = vpop.f32.mrf.mxu0
    %988 = vdwg.mxu0
    %989 = vmatpush.bf16.msra.mxu0 %v818
    %990 = vmatpush.bf16.msra.mxu0 %v814
    %991 = vmatpush.bf16.msra.mxu0 %v810
    %992 = vmatpush.bf16.msra.mxu0 %v806
    %993 = vmatpush.bf16.msra.mxu0 %v802
    %994 = vmatpush.bf16.msra.mxu0 %v798
    %995 = vmatpush.bf16.msra.mxu0 %v794
    %996 = vmatpush.bf16.msra.mxu0 %v790
    %997 = vmatmul.bf16.gmra.mxu0 %v171
    %v998 = vpop.f32.mrf.mxu0
    %v999 = vadd.f32 %v986, %v998
    %v1000 = vpop.f32.mrf.mxu0
    %1001 = vdwg.mxu0
    %1002 = vmatpush.bf16.msra.mxu0 %v723
    %1003 = vmatpush.bf16.msra.mxu0 %v719
    %1004 = vmatpush.bf16.msra.mxu0 %v715
    %1005 = vmatpush.bf16.msra.mxu0 %v711
    %1006 = vmatpush.bf16.msra.mxu0 %v707
    %1007 = vmatpush.bf16.msra.mxu0 %v703
    %1008 = vmatpush.bf16.msra.mxu0 %v699
    %1009 = vmatpush.bf16.msra.mxu0 %v695
    %1010 = vmatmul.bf16.gmra.mxu0 %v168
    %v1011 = vpop.f32.mrf.mxu0
    %v1012 = vadd.f32 %v303, %v1011
    %v1013 = vpop.f32.mrf.mxu0
    %1014 = vdwg.mxu0
    %1015 = vmatpush.bf16.msra.mxu0 %v755
    %1016 = vmatpush.bf16.msra.mxu0 %v751
    %1017 = vmatpush.bf16.msra.mxu0 %v747
    %1018 = vmatpush.bf16.msra.mxu0 %v743
    %1019 = vmatpush.bf16.msra.mxu0 %v739
    %1020 = vmatpush.bf16.msra.mxu0 %v735
    %1021 = vmatpush.bf16.msra.mxu0 %v731
    %1022 = vmatpush.bf16.msra.mxu0 %v727
    %1023 = vmatmul.bf16.gmra.mxu0 %v169
    %v1024 = vpop.f32.mrf.mxu0
    %v1025 = vadd.f32 %v1012, %v1024
    %v1026 = vpop.f32.mrf.mxu0
    %1027 = vdwg.mxu0
    %1028 = vmatpush.bf16.msra.mxu0 %v787
    %1029 = vmatpush.bf16.msra.mxu0 %v783
    %1030 = vmatpush.bf16.msra.mxu0 %v779
    %1031 = vmatpush.bf16.msra.mxu0 %v775
    %1032 = vmatpush.bf16.msra.mxu0 %v771
    %1033 = vmatpush.bf16.msra.mxu0 %v767
    %1034 = vmatpush.bf16.msra.mxu0 %v763
    %1035 = vmatpush.bf16.msra.mxu0 %v759
    %1036 = vmatmul.bf16.gmra.mxu0 %v170
    %v1037 = vpop.f32.mrf.mxu0
    %v1038 = vadd.f32 %v1025, %v1037
    %v1039 = vpop.f32.mrf.mxu0
    %1040 = vdwg.mxu0
    %1041 = vmatpush.bf16.msra.mxu0 %v819
    %1042 = vmatpush.bf16.msra.mxu0 %v815
    %1043 = vmatpush.bf16.msra.mxu0 %v811
    %1044 = vmatpush.bf16.msra.mxu0 %v807
    %1045 = vmatpush.bf16.msra.mxu0 %v803
    %1046 = vmatpush.bf16.msra.mxu0 %v799
    %1047 = vmatpush.bf16.msra.mxu0 %v795
    %1048 = vmatpush.bf16.msra.mxu0 %v791
    %1049 = vmatmul.bf16.gmra.mxu0 %v171
    %v1050 = vpop.f32.mrf.mxu0
    %v1051 = vadd.f32 %v1038, %v1050
    %v1052 = vpop.f32.mrf.mxu0
    %1053 = vdwg.mxu0
    %1054 = vmatpush.bf16.msra.mxu0 %v724
    %1055 = vmatpush.bf16.msra.mxu0 %v720
    %1056 = vmatpush.bf16.msra.mxu0 %v716
    %1057 = vmatpush.bf16.msra.mxu0 %v712
    %1058 = vmatpush.bf16.msra.mxu0 %v708
    %1059 = vmatpush.bf16.msra.mxu0 %v704
    %1060 = vmatpush.bf16.msra.mxu0 %v700
    %1061 = vmatpush.bf16.msra.mxu0 %v696
    %1062 = vmatmul.bf16.gmra.mxu0 %v168
    %v1063 = vpop.f32.mrf.mxu0
    %v1064 = vadd.f32 %v304, %v1063
    %v1065 = vpop.f32.mrf.mxu0
    %1066 = vdwg.mxu0
    %1067 = vmatpush.bf16.msra.mxu0 %v756
    %1068 = vmatpush.bf16.msra.mxu0 %v752
    %1069 = vmatpush.bf16.msra.mxu0 %v748
    %1070 = vmatpush.bf16.msra.mxu0 %v744
    %1071 = vmatpush.bf16.msra.mxu0 %v740
    %1072 = vmatpush.bf16.msra.mxu0 %v736
    %1073 = vmatpush.bf16.msra.mxu0 %v732
    %1074 = vmatpush.bf16.msra.mxu0 %v728
    %1075 = vmatmul.bf16.gmra.mxu0 %v169
    %v1076 = vpop.f32.mrf.mxu0
    %v1077 = vadd.f32 %v1064, %v1076
    %v1078 = vpop.f32.mrf.mxu0
    %1079 = vdwg.mxu0
    %1080 = vmatpush.bf16.msra.mxu0 %v788
    %1081 = vmatpush.bf16.msra.mxu0 %v784
    %1082 = vmatpush.bf16.msra.mxu0 %v780
    %1083 = vmatpush.bf16.msra.mxu0 %v776
    %1084 = vmatpush.bf16.msra.mxu0 %v772
    %1085 = vmatpush.bf16.msra.mxu0 %v768
    %1086 = vmatpush.bf16.msra.mxu0 %v764
    %1087 = vmatpush.bf16.msra.mxu0 %v760
    %1088 = vmatmul.bf16.gmra.mxu0 %v170
    %v1089 = vpop.f32.mrf.mxu0
    %v1090 = vadd.f32 %v1077, %v1089
    %v1091 = vpop.f32.mrf.mxu0
    %1092 = vdwg.mxu0
    %1093 = vmatpush.bf16.msra.mxu0 %v820
    %1094 = vmatpush.bf16.msra.mxu0 %v816
    %1095 = vmatpush.bf16.msra.mxu0 %v812
    %1096 = vmatpush.bf16.msra.mxu0 %v808
    %1097 = vmatpush.bf16.msra.mxu0 %v804
    %1098 = vmatpush.bf16.msra.mxu0 %v800
    %1099 = vmatpush.bf16.msra.mxu0 %v796
    %1100 = vmatpush.bf16.msra.mxu0 %v792
    %1101 = vmatmul.bf16.gmra.mxu0 %v171
    %v1102 = vpop.f32.mrf.mxu0
    %v1103 = vadd.f32 %v1090, %v1102
    %v1104 = vpop.f32.mrf.mxu0
    %1105 = vdwg.mxu0
    %1106 = vmatpush.bf16.msra.mxu0 %v725
    %1107 = vmatpush.bf16.msra.mxu0 %v721
    %1108 = vmatpush.bf16.msra.mxu0 %v717
    %1109 = vmatpush.bf16.msra.mxu0 %v713
    %1110 = vmatpush.bf16.msra.mxu0 %v709
    %1111 = vmatpush.bf16.msra.mxu0 %v705
    %1112 = vmatpush.bf16.msra.mxu0 %v701
    %1113 = vmatpush.bf16.msra.mxu0 %v697
    %1114 = vmatmul.bf16.gmra.mxu0 %v168
    %v1115 = vpop.f32.mrf.mxu0
    %v1116 = vadd.f32 %v305, %v1115
    %v1117 = vpop.f32.mrf.mxu0
    %1118 = vdwg.mxu0
    %1119 = vmatpush.bf16.msra.mxu0 %v757
    %1120 = vmatpush.bf16.msra.mxu0 %v753
    %1121 = vmatpush.bf16.msra.mxu0 %v749
    %1122 = vmatpush.bf16.msra.mxu0 %v745
    %1123 = vmatpush.bf16.msra.mxu0 %v741
    %1124 = vmatpush.bf16.msra.mxu0 %v737
    %1125 = vmatpush.bf16.msra.mxu0 %v733
    %1126 = vmatpush.bf16.msra.mxu0 %v729
    %1127 = vmatmul.bf16.gmra.mxu0 %v169
    %v1128 = vpop.f32.mrf.mxu0
    %v1129 = vadd.f32 %v1116, %v1128
    %v1130 = vpop.f32.mrf.mxu0
    %1131 = vdwg.mxu0
    %1132 = vmatpush.bf16.msra.mxu0 %v789
    %1133 = vmatpush.bf16.msra.mxu0 %v785
    %1134 = vmatpush.bf16.msra.mxu0 %v781
    %1135 = vmatpush.bf16.msra.mxu0 %v777
    %1136 = vmatpush.bf16.msra.mxu0 %v773
    %1137 = vmatpush.bf16.msra.mxu0 %v769
    %1138 = vmatpush.bf16.msra.mxu0 %v765
    %1139 = vmatpush.bf16.msra.mxu0 %v761
    %1140 = vmatmul.bf16.gmra.mxu0 %v170
    %v1141 = vpop.f32.mrf.mxu0
    %v1142 = vadd.f32 %v1129, %v1141
    %v1143 = vpop.f32.mrf.mxu0
    %1144 = vdwg.mxu0
    %1145 = vmatpush.bf16.msra.mxu0 %v821
    %1146 = vmatpush.bf16.msra.mxu0 %v817
    %1147 = vmatpush.bf16.msra.mxu0 %v813
    %1148 = vmatpush.bf16.msra.mxu0 %v809
    %1149 = vmatpush.bf16.msra.mxu0 %v805
    %1150 = vmatpush.bf16.msra.mxu0 %v801
    %1151 = vmatpush.bf16.msra.mxu0 %v797
    %1152 = vmatpush.bf16.msra.mxu0 %v793
    %1153 = vmatmul.bf16.gmra.mxu0 %v171
    %v1154 = vpop.f32.mrf.mxu0
    %v1155 = vadd.f32 %v1142, %v1154
    %v1156 = vpop.f32.mrf.mxu0
    %1157 = vdwg.mxu0
    %vm1158 = vcmp.gt.f32.partialorder %v999, 0.0
    %vm1159 = vcmp.gt.f32.partialorder %v1051, 0.0
    %vm1160 = vcmp.gt.f32.partialorder %v1103, 0.0
    %vm1161 = vcmp.gt.f32.partialorder %v1155, 0.0
    %v1162 = vmul.f32 %v999, 0.01
    %v1163 = vmul.f32 %v1051, 0.01
    %v1164 = vmul.f32 %v1103, 0.01
    %v1165 = vmul.f32 %v1155, 0.01
    %v1166 = vsel %vm1158, %v999, %v1162
    %v1167 = vsel %vm1159, %v1051, %v1163
    %v1168 = vsel %vm1160, %v1103, %v1164
    %v1169 = vsel %vm1161, %v1155, %v1165
    %v1170 = vpack.c.bf16 %v1166, %v1166
    %v1171 = vpack.c.bf16 %v1167, %v1167
    %v1172 = vpack.c.bf16 %v1168, %v1168
    %v1173 = vpack.c.bf16 %v1169, %v1169
    %v1174 = vld [vmem:[#allocation4] sm:$0xff]
    %v1175 = vld [vmem:[#allocation4 + $0x8] sm:$0xff]
    %v1176 = vld [vmem:[#allocation4 + $0x10] sm:$0xff]
    %v1177 = vld [vmem:[#allocation4 + $0x18] sm:$0xff]
    %v1178 = vld [vmem:[#allocation4 + $0x20] sm:$0xff]
    %v1179 = vld [vmem:[#allocation4 + $0x28] sm:$0xff]
    %v1180 = vld [vmem:[#allocation4 + $0x30] sm:$0xff]
    %v1181 = vld [vmem:[#allocation4 + $0x38] sm:$0xff]
    %v1182 = vld [vmem:[#allocation4 + $0x40] sm:$0xff]
    %v1183 = vld [vmem:[#allocation4 + $0x48] sm:$0xff]
    %v1184 = vld [vmem:[#allocation4 + $0x50] sm:$0xff]
    %v1185 = vld [vmem:[#allocation4 + $0x58] sm:$0xff]
    %v1186 = vld [vmem:[#allocation4 + $0x60] sm:$0xff]
    %v1187 = vld [vmem:[#allocation4 + $0x68] sm:$0xff]
    %v1188 = vld [vmem:[#allocation4 + $0x70] sm:$0xff]
    %v1189 = vld [vmem:[#allocation4 + $0x78] sm:$0xff]
    %v1190 = vld [vmem:[#allocation4 + $0x80] sm:$0xff]
    %v1191 = vld [vmem:[#allocation4 + $0x88] sm:$0xff]
    %v1192 = vld [vmem:[#allocation4 + $0x90] sm:$0xff]
    %v1193 = vld [vmem:[#allocation4 + $0x98] sm:$0xff]
    %v1194 = vld [vmem:[#allocation4 + $0xa0] sm:$0xff]
    %v1195 = vld [vmem:[#allocation4 + $0xa8] sm:$0xff]
    %v1196 = vld [vmem:[#allocation4 + $0xb0] sm:$0xff]
    %v1197 = vld [vmem:[#allocation4 + $0xb8] sm:$0xff]
    %v1198 = vld [vmem:[#allocation4 + $0xc0] sm:$0xff]
    %v1199 = vld [vmem:[#allocation4 + $0xc8] sm:$0xff]
    %v1200 = vld [vmem:[#allocation4 + $0xd0] sm:$0xff]
    %v1201 = vld [vmem:[#allocation4 + $0xd8] sm:$0xff]
    %v1202 = vld [vmem:[#allocation4 + $0xe0] sm:$0xff]
    %v1203 = vld [vmem:[#allocation4 + $0xe8] sm:$0xff]
    %v1204 = vld [vmem:[#allocation4 + $0xf0] sm:$0xff]
    %v1205 = vld [vmem:[#allocation4 + $0xf8] sm:$0xff]
    %v1206 = vld [vmem:[#allocation4 + $0x100] sm:$0xff]
    %v1207 = vld [vmem:[#allocation4 + $0x108] sm:$0xff]
    %v1208 = vld [vmem:[#allocation4 + $0x110] sm:$0xff]
    %v1209 = vld [vmem:[#allocation4 + $0x118] sm:$0xff]
    %v1210 = vld [vmem:[#allocation4 + $0x120] sm:$0xff]
    %v1211 = vld [vmem:[#allocation4 + $0x128] sm:$0xff]
    %v1212 = vld [vmem:[#allocation4 + $0x130] sm:$0xff]
    %v1213 = vld [vmem:[#allocation4 + $0x138] sm:$0xff]
    %v1214 = vld [vmem:[#allocation4 + $0x140] sm:$0xff]
    %v1215 = vld [vmem:[#allocation4 + $0x148] sm:$0xff]
    %v1216 = vld [vmem:[#allocation4 + $0x150] sm:$0xff]
    %v1217 = vld [vmem:[#allocation4 + $0x158] sm:$0xff]
    %v1218 = vld [vmem:[#allocation4 + $0x160] sm:$0xff]
    %v1219 = vld [vmem:[#allocation4 + $0x168] sm:$0xff]
    %v1220 = vld [vmem:[#allocation4 + $0x170] sm:$0xff]
    %v1221 = vld [vmem:[#allocation4 + $0x178] sm:$0xff]
    %v1222 = vld [vmem:[#allocation4 + $0x180] sm:$0xff]
    %v1223 = vld [vmem:[#allocation4 + $0x188] sm:$0xff]
    %v1224 = vld [vmem:[#allocation4 + $0x190] sm:$0xff]
    %v1225 = vld [vmem:[#allocation4 + $0x198] sm:$0xff]
    %v1226 = vld [vmem:[#allocation4 + $0x1a0] sm:$0xff]
    %v1227 = vld [vmem:[#allocation4 + $0x1a8] sm:$0xff]
    %v1228 = vld [vmem:[#allocation4 + $0x1b0] sm:$0xff]
    %v1229 = vld [vmem:[#allocation4 + $0x1b8] sm:$0xff]
    %v1230 = vld [vmem:[#allocation4 + $0x1c0] sm:$0xff]
    %v1231 = vld [vmem:[#allocation4 + $0x1c8] sm:$0xff]
    %v1232 = vld [vmem:[#allocation4 + $0x1d0] sm:$0xff]
    %v1233 = vld [vmem:[#allocation4 + $0x1d8] sm:$0xff]
    %v1234 = vld [vmem:[#allocation4 + $0x1e0] sm:$0xff]
    %v1235 = vld [vmem:[#allocation4 + $0x1e8] sm:$0xff]
    %v1236 = vld [vmem:[#allocation4 + $0x1f0] sm:$0xff]
    %v1237 = vld [vmem:[#allocation4 + $0x1f8] sm:$0xff]
    %v1238 = vld [vmem:[#allocation4 + $0x200] sm:$0xff]
    %v1239 = vld [vmem:[#allocation4 + $0x208] sm:$0xff]
    %v1240 = vld [vmem:[#allocation4 + $0x210] sm:$0xff]
    %v1241 = vld [vmem:[#allocation4 + $0x218] sm:$0xff]
    %v1242 = vld [vmem:[#allocation4 + $0x220] sm:$0xff]
    %v1243 = vld [vmem:[#allocation4 + $0x228] sm:$0xff]
    %v1244 = vld [vmem:[#allocation4 + $0x230] sm:$0xff]
    %v1245 = vld [vmem:[#allocation4 + $0x238] sm:$0xff]
    %v1246 = vld [vmem:[#allocation4 + $0x240] sm:$0xff]
    %v1247 = vld [vmem:[#allocation4 + $0x248] sm:$0xff]
    %v1248 = vld [vmem:[#allocation4 + $0x250] sm:$0xff]
    %v1249 = vld [vmem:[#allocation4 + $0x258] sm:$0xff]
    %v1250 = vld [vmem:[#allocation4 + $0x260] sm:$0xff]
    %v1251 = vld [vmem:[#allocation4 + $0x268] sm:$0xff]
    %v1252 = vld [vmem:[#allocation4 + $0x270] sm:$0xff]
    %v1253 = vld [vmem:[#allocation4 + $0x278] sm:$0xff]
    %v1254 = vld [vmem:[#allocation4 + $0x280] sm:$0xff]
    %v1255 = vld [vmem:[#allocation4 + $0x288] sm:$0xff]
    %v1256 = vld [vmem:[#allocation4 + $0x290] sm:$0xff]
    %v1257 = vld [vmem:[#allocation4 + $0x298] sm:$0xff]
    %v1258 = vld [vmem:[#allocation4 + $0x2a0] sm:$0xff]
    %v1259 = vld [vmem:[#allocation4 + $0x2a8] sm:$0xff]
    %v1260 = vld [vmem:[#allocation4 + $0x2b0] sm:$0xff]
    %v1261 = vld [vmem:[#allocation4 + $0x2b8] sm:$0xff]
    %v1262 = vld [vmem:[#allocation4 + $0x2c0] sm:$0xff]
    %v1263 = vld [vmem:[#allocation4 + $0x2c8] sm:$0xff]
    %v1264 = vld [vmem:[#allocation4 + $0x2d0] sm:$0xff]
    %v1265 = vld [vmem:[#allocation4 + $0x2d8] sm:$0xff]
    %v1266 = vld [vmem:[#allocation4 + $0x2e0] sm:$0xff]
    %v1267 = vld [vmem:[#allocation4 + $0x2e8] sm:$0xff]
    %v1268 = vld [vmem:[#allocation4 + $0x2f0] sm:$0xff]
    %v1269 = vld [vmem:[#allocation4 + $0x2f8] sm:$0xff]
    %v1270 = vld [vmem:[#allocation4 + $0x300] sm:$0xff]
    %v1271 = vld [vmem:[#allocation4 + $0x308] sm:$0xff]
    %v1272 = vld [vmem:[#allocation4 + $0x310] sm:$0xff]
    %v1273 = vld [vmem:[#allocation4 + $0x318] sm:$0xff]
    %v1274 = vld [vmem:[#allocation4 + $0x320] sm:$0xff]
    %v1275 = vld [vmem:[#allocation4 + $0x328] sm:$0xff]
    %v1276 = vld [vmem:[#allocation4 + $0x330] sm:$0xff]
    %v1277 = vld [vmem:[#allocation4 + $0x338] sm:$0xff]
    %v1278 = vld [vmem:[#allocation4 + $0x340] sm:$0xff]
    %v1279 = vld [vmem:[#allocation4 + $0x348] sm:$0xff]
    %v1280 = vld [vmem:[#allocation4 + $0x350] sm:$0xff]
    %v1281 = vld [vmem:[#allocation4 + $0x358] sm:$0xff]
    %v1282 = vld [vmem:[#allocation4 + $0x360] sm:$0xff]
    %v1283 = vld [vmem:[#allocation4 + $0x368] sm:$0xff]
    %v1284 = vld [vmem:[#allocation4 + $0x370] sm:$0xff]
    %v1285 = vld [vmem:[#allocation4 + $0x378] sm:$0xff]
    %v1286 = vld [vmem:[#allocation4 + $0x380] sm:$0xff]
    %v1287 = vld [vmem:[#allocation4 + $0x388] sm:$0xff]
    %v1288 = vld [vmem:[#allocation4 + $0x390] sm:$0xff]
    %v1289 = vld [vmem:[#allocation4 + $0x398] sm:$0xff]
    %v1290 = vld [vmem:[#allocation4 + $0x3a0] sm:$0xff]
    %v1291 = vld [vmem:[#allocation4 + $0x3a8] sm:$0xff]
    %v1292 = vld [vmem:[#allocation4 + $0x3b0] sm:$0xff]
    %v1293 = vld [vmem:[#allocation4 + $0x3b8] sm:$0xff]
    %v1294 = vld [vmem:[#allocation4 + $0x3c0] sm:$0xff]
    %v1295 = vld [vmem:[#allocation4 + $0x3c8] sm:$0xff]
    %v1296 = vld [vmem:[#allocation4 + $0x3d0] sm:$0xff]
    %v1297 = vld [vmem:[#allocation4 + $0x3d8] sm:$0xff]
    %v1298 = vld [vmem:[#allocation4 + $0x3e0] sm:$0xff]
    %v1299 = vld [vmem:[#allocation4 + $0x3e8] sm:$0xff]
    %v1300 = vld [vmem:[#allocation4 + $0x3f0] sm:$0xff]
    %v1301 = vld [vmem:[#allocation4 + $0x3f8] sm:$0xff]
    %v1302 = vld [vmem:[%s6] sm:$0xf]
    %v1304 = vperm.slane %v1302, 0
    %v1305 = vperm.slane %v1302, 1
    %v1306 = vperm.slane %v1302, 2
    %v1307 = vperm.slane %v1302, 3
    %v1440 = vunpack.c.l.b16 %v1174
    %v1441 = vunpack.c.h.b16 %v1174
    %v1442 = vunpack.c.l.b16 %v1175
    %v1443 = vunpack.c.h.b16 %v1175
    %v1444 = vunpack.c.l.b16 %v1176
    %v1445 = vunpack.c.h.b16 %v1176
    %v1446 = vunpack.c.l.b16 %v1177
    %v1447 = vunpack.c.h.b16 %v1177
    %v1448 = vunpack.c.l.b16 %v1178
    %v1449 = vunpack.c.h.b16 %v1178
    %v1450 = vunpack.c.l.b16 %v1179
    %v1451 = vunpack.c.h.b16 %v1179
    %v1452 = vunpack.c.l.b16 %v1180
    %v1453 = vunpack.c.h.b16 %v1180
    %v1454 = vunpack.c.l.b16 %v1181
    %v1455 = vunpack.c.h.b16 %v1181
    %v1456 = vunpack.c.l.b16 %v1182
    %v1457 = vunpack.c.h.b16 %v1182
    %v1458 = vunpack.c.l.b16 %v1183
    %v1459 = vunpack.c.h.b16 %v1183
    %v1460 = vunpack.c.l.b16 %v1184
    %v1461 = vunpack.c.h.b16 %v1184
    %v1462 = vunpack.c.l.b16 %v1185
    %v1463 = vunpack.c.h.b16 %v1185
    %v1464 = vunpack.c.l.b16 %v1186
    %v1465 = vunpack.c.h.b16 %v1186
    %v1466 = vunpack.c.l.b16 %v1187
    %v1467 = vunpack.c.h.b16 %v1187
    %v1468 = vunpack.c.l.b16 %v1188
    %v1469 = vunpack.c.h.b16 %v1188
    %v1470 = vunpack.c.l.b16 %v1189
    %v1471 = vunpack.c.h.b16 %v1189
    %v1472 = vunpack.c.l.b16 %v1190
    %v1473 = vunpack.c.h.b16 %v1190
    %v1474 = vunpack.c.l.b16 %v1191
    %v1475 = vunpack.c.h.b16 %v1191
    %v1476 = vunpack.c.l.b16 %v1192
    %v1477 = vunpack.c.h.b16 %v1192
    %v1478 = vunpack.c.l.b16 %v1193
    %v1479 = vunpack.c.h.b16 %v1193
    %v1480 = vunpack.c.l.b16 %v1194
    %v1481 = vunpack.c.h.b16 %v1194
    %v1482 = vunpack.c.l.b16 %v1195
    %v1483 = vunpack.c.h.b16 %v1195
    %v1484 = vunpack.c.l.b16 %v1196
    %v1485 = vunpack.c.h.b16 %v1196
    %v1486 = vunpack.c.l.b16 %v1197
    %v1487 = vunpack.c.h.b16 %v1197
    %v1488 = vunpack.c.l.b16 %v1198
    %v1489 = vunpack.c.h.b16 %v1198
    %v1490 = vunpack.c.l.b16 %v1199
    %v1491 = vunpack.c.h.b16 %v1199
    %v1492 = vunpack.c.l.b16 %v1200
    %v1493 = vunpack.c.h.b16 %v1200
    %v1494 = vunpack.c.l.b16 %v1201
    %v1495 = vunpack.c.h.b16 %v1201
    %v1496 = vunpack.c.l.b16 %v1202
    %v1497 = vunpack.c.h.b16 %v1202
    %v1498 = vunpack.c.l.b16 %v1203
    %v1499 = vunpack.c.h.b16 %v1203
    %v1500 = vunpack.c.l.b16 %v1204
    %v1501 = vunpack.c.h.b16 %v1204
    %v1502 = vunpack.c.l.b16 %v1205
    %v1503 = vunpack.c.h.b16 %v1205
    %v1504 = vunpack.c.l.b16 %v1206
    %v1505 = vunpack.c.h.b16 %v1206
    %v1506 = vunpack.c.l.b16 %v1207
    %v1507 = vunpack.c.h.b16 %v1207
    %v1508 = vunpack.c.l.b16 %v1208
    %v1509 = vunpack.c.h.b16 %v1208
    %v1510 = vunpack.c.l.b16 %v1209
    %v1511 = vunpack.c.h.b16 %v1209
    %v1512 = vunpack.c.l.b16 %v1210
    %v1513 = vunpack.c.h.b16 %v1210
    %v1514 = vunpack.c.l.b16 %v1211
    %v1515 = vunpack.c.h.b16 %v1211
    %v1516 = vunpack.c.l.b16 %v1212
    %v1517 = vunpack.c.h.b16 %v1212
    %v1518 = vunpack.c.l.b16 %v1213
    %v1519 = vunpack.c.h.b16 %v1213
    %v1520 = vunpack.c.l.b16 %v1214
    %v1521 = vunpack.c.h.b16 %v1214
    %v1522 = vunpack.c.l.b16 %v1215
    %v1523 = vunpack.c.h.b16 %v1215
    %v1524 = vunpack.c.l.b16 %v1216
    %v1525 = vunpack.c.h.b16 %v1216
    %v1526 = vunpack.c.l.b16 %v1217
    %v1527 = vunpack.c.h.b16 %v1217
    %v1528 = vunpack.c.l.b16 %v1218
    %v1529 = vunpack.c.h.b16 %v1218
    %v1530 = vunpack.c.l.b16 %v1219
    %v1531 = vunpack.c.h.b16 %v1219
    %v1532 = vunpack.c.l.b16 %v1220
    %v1533 = vunpack.c.h.b16 %v1220
    %v1534 = vunpack.c.l.b16 %v1221
    %v1535 = vunpack.c.h.b16 %v1221
    %v1536 = vunpack.c.l.b16 %v1222
    %v1537 = vunpack.c.h.b16 %v1222
    %v1538 = vunpack.c.l.b16 %v1223
    %v1539 = vunpack.c.h.b16 %v1223
    %v1540 = vunpack.c.l.b16 %v1224
    %v1541 = vunpack.c.h.b16 %v1224
    %v1542 = vunpack.c.l.b16 %v1225
    %v1543 = vunpack.c.h.b16 %v1225
    %v1544 = vunpack.c.l.b16 %v1226
    %v1545 = vunpack.c.h.b16 %v1226
    %v1546 = vunpack.c.l.b16 %v1227
    %v1547 = vunpack.c.h.b16 %v1227
    %v1548 = vunpack.c.l.b16 %v1228
    %v1549 = vunpack.c.h.b16 %v1228
    %v1550 = vunpack.c.l.b16 %v1229
    %v1551 = vunpack.c.h.b16 %v1229
    %v1552 = vunpack.c.l.b16 %v1230
    %v1553 = vunpack.c.h.b16 %v1230
    %v1554 = vunpack.c.l.b16 %v1231
    %v1555 = vunpack.c.h.b16 %v1231
    %v1556 = vunpack.c.l.b16 %v1232
    %v1557 = vunpack.c.h.b16 %v1232
    %v1558 = vunpack.c.l.b16 %v1233
    %v1559 = vunpack.c.h.b16 %v1233
    %v1560 = vunpack.c.l.b16 %v1234
    %v1561 = vunpack.c.h.b16 %v1234
    %v1562 = vunpack.c.l.b16 %v1235
    %v1563 = vunpack.c.h.b16 %v1235
    %v1564 = vunpack.c.l.b16 %v1236
    %v1565 = vunpack.c.h.b16 %v1236
    %v1566 = vunpack.c.l.b16 %v1237
    %v1567 = vunpack.c.h.b16 %v1237
    %v1568 = vunpack.c.l.b16 %v1238
    %v1569 = vunpack.c.h.b16 %v1238
    %v1570 = vunpack.c.l.b16 %v1239
    %v1571 = vunpack.c.h.b16 %v1239
    %v1572 = vunpack.c.l.b16 %v1240
    %v1573 = vunpack.c.h.b16 %v1240
    %v1574 = vunpack.c.l.b16 %v1241
    %v1575 = vunpack.c.h.b16 %v1241
    %v1576 = vunpack.c.l.b16 %v1242
    %v1577 = vunpack.c.h.b16 %v1242
    %v1578 = vunpack.c.l.b16 %v1243
    %v1579 = vunpack.c.h.b16 %v1243
    %v1580 = vunpack.c.l.b16 %v1244
    %v1581 = vunpack.c.h.b16 %v1244
    %v1582 = vunpack.c.l.b16 %v1245
    %v1583 = vunpack.c.h.b16 %v1245
    %v1584 = vunpack.c.l.b16 %v1246
    %v1585 = vunpack.c.h.b16 %v1246
    %v1586 = vunpack.c.l.b16 %v1247
    %v1587 = vunpack.c.h.b16 %v1247
    %v1588 = vunpack.c.l.b16 %v1248
    %v1589 = vunpack.c.h.b16 %v1248
    %v1590 = vunpack.c.l.b16 %v1249
    %v1591 = vunpack.c.h.b16 %v1249
    %v1592 = vunpack.c.l.b16 %v1250
    %v1593 = vunpack.c.h.b16 %v1250
    %v1594 = vunpack.c.l.b16 %v1251
    %v1595 = vunpack.c.h.b16 %v1251
    %v1596 = vunpack.c.l.b16 %v1252
    %v1597 = vunpack.c.h.b16 %v1252
    %v1598 = vunpack.c.l.b16 %v1253
    %v1599 = vunpack.c.h.b16 %v1253
    %v1600 = vunpack.c.l.b16 %v1254
    %v1601 = vunpack.c.h.b16 %v1254
    %v1602 = vunpack.c.l.b16 %v1255
    %v1603 = vunpack.c.h.b16 %v1255
    %v1604 = vunpack.c.l.b16 %v1256
    %v1605 = vunpack.c.h.b16 %v1256
    %v1606 = vunpack.c.l.b16 %v1257
    %v1607 = vunpack.c.h.b16 %v1257
    %v1608 = vunpack.c.l.b16 %v1258
    %v1609 = vunpack.c.h.b16 %v1258
    %v1610 = vunpack.c.l.b16 %v1259
    %v1611 = vunpack.c.h.b16 %v1259
    %v1612 = vunpack.c.l.b16 %v1260
    %v1613 = vunpack.c.h.b16 %v1260
    %v1614 = vunpack.c.l.b16 %v1261
    %v1615 = vunpack.c.h.b16 %v1261
    %v1616 = vunpack.c.l.b16 %v1262
    %v1617 = vunpack.c.h.b16 %v1262
    %v1618 = vunpack.c.l.b16 %v1263
    %v1619 = vunpack.c.h.b16 %v1263
    %v1620 = vunpack.c.l.b16 %v1264
    %v1621 = vunpack.c.h.b16 %v1264
    %v1622 = vunpack.c.l.b16 %v1265
    %v1623 = vunpack.c.h.b16 %v1265
    %v1624 = vunpack.c.l.b16 %v1266
    %v1625 = vunpack.c.h.b16 %v1266
    %v1626 = vunpack.c.l.b16 %v1267
    %v1627 = vunpack.c.h.b16 %v1267
    %v1628 = vunpack.c.l.b16 %v1268
    %v1629 = vunpack.c.h.b16 %v1268
    %v1630 = vunpack.c.l.b16 %v1269
    %v1631 = vunpack.c.h.b16 %v1269
    %v1632 = vunpack.c.l.b16 %v1270
    %v1633 = vunpack.c.h.b16 %v1270
    %v1634 = vunpack.c.l.b16 %v1271
    %v1635 = vunpack.c.h.b16 %v1271
    %v1636 = vunpack.c.l.b16 %v1272
    %v1637 = vunpack.c.h.b16 %v1272
    %v1638 = vunpack.c.l.b16 %v1273
    %v1639 = vunpack.c.h.b16 %v1273
    %v1640 = vunpack.c.l.b16 %v1274
    %v1641 = vunpack.c.h.b16 %v1274
    %v1642 = vunpack.c.l.b16 %v1275
    %v1643 = vunpack.c.h.b16 %v1275
    %v1644 = vunpack.c.l.b16 %v1276
    %v1645 = vunpack.c.h.b16 %v1276
    %v1646 = vunpack.c.l.b16 %v1277
    %v1647 = vunpack.c.h.b16 %v1277
    %v1648 = vunpack.c.l.b16 %v1278
    %v1649 = vunpack.c.h.b16 %v1278
    %v1650 = vunpack.c.l.b16 %v1279
    %v1651 = vunpack.c.h.b16 %v1279
    %v1652 = vunpack.c.l.b16 %v1280
    %v1653 = vunpack.c.h.b16 %v1280
    %v1654 = vunpack.c.l.b16 %v1281
    %v1655 = vunpack.c.h.b16 %v1281
    %v1656 = vunpack.c.l.b16 %v1282
    %v1657 = vunpack.c.h.b16 %v1282
    %v1658 = vunpack.c.l.b16 %v1283
    %v1659 = vunpack.c.h.b16 %v1283
    %v1660 = vunpack.c.l.b16 %v1284
    %v1661 = vunpack.c.h.b16 %v1284
    %v1662 = vunpack.c.l.b16 %v1285
    %v1663 = vunpack.c.h.b16 %v1285
    %v1664 = vunpack.c.l.b16 %v1286
    %v1665 = vunpack.c.h.b16 %v1286
    %v1666 = vunpack.c.l.b16 %v1287
    %v1667 = vunpack.c.h.b16 %v1287
    %v1668 = vunpack.c.l.b16 %v1288
    %v1669 = vunpack.c.h.b16 %v1288
    %v1670 = vunpack.c.l.b16 %v1289
    %v1671 = vunpack.c.h.b16 %v1289
    %v1672 = vunpack.c.l.b16 %v1290
    %v1673 = vunpack.c.h.b16 %v1290
    %v1674 = vunpack.c.l.b16 %v1291
    %v1675 = vunpack.c.h.b16 %v1291
    %v1676 = vunpack.c.l.b16 %v1292
    %v1677 = vunpack.c.h.b16 %v1292
    %v1678 = vunpack.c.l.b16 %v1293
    %v1679 = vunpack.c.h.b16 %v1293
    %v1680 = vunpack.c.l.b16 %v1294
    %v1681 = vunpack.c.h.b16 %v1294
    %v1682 = vunpack.c.l.b16 %v1295
    %v1683 = vunpack.c.h.b16 %v1295
    %v1684 = vunpack.c.l.b16 %v1296
    %v1685 = vunpack.c.h.b16 %v1296
    %v1686 = vunpack.c.l.b16 %v1297
    %v1687 = vunpack.c.h.b16 %v1297
    %v1688 = vunpack.c.l.b16 %v1298
    %v1689 = vunpack.c.h.b16 %v1298
    %v1690 = vunpack.c.l.b16 %v1299
    %v1691 = vunpack.c.h.b16 %v1299
    %v1692 = vunpack.c.l.b16 %v1300
    %v1693 = vunpack.c.h.b16 %v1300
    %v1694 = vunpack.c.l.b16 %v1301
    %v1695 = vunpack.c.h.b16 %v1301
    %v1696 = vpack.c.b16 %v1444, %v1440
    %v1697 = vpack.c.b16 %v1445, %v1441
    %v1698 = vpack.c.b16 %v1446, %v1442
    %v1699 = vpack.c.b16 %v1447, %v1443
    %v1700 = vpack.c.b16 %v1452, %v1448
    %v1701 = vpack.c.b16 %v1453, %v1449
    %v1702 = vpack.c.b16 %v1454, %v1450
    %v1703 = vpack.c.b16 %v1455, %v1451
    %v1704 = vpack.c.b16 %v1460, %v1456
    %v1705 = vpack.c.b16 %v1461, %v1457
    %v1706 = vpack.c.b16 %v1462, %v1458
    %v1707 = vpack.c.b16 %v1463, %v1459
    %v1708 = vpack.c.b16 %v1468, %v1464
    %v1709 = vpack.c.b16 %v1469, %v1465
    %v1710 = vpack.c.b16 %v1470, %v1466
    %v1711 = vpack.c.b16 %v1471, %v1467
    %v1712 = vpack.c.b16 %v1476, %v1472
    %v1713 = vpack.c.b16 %v1477, %v1473
    %v1714 = vpack.c.b16 %v1478, %v1474
    %v1715 = vpack.c.b16 %v1479, %v1475
    %v1716 = vpack.c.b16 %v1484, %v1480
    %v1717 = vpack.c.b16 %v1485, %v1481
    %v1718 = vpack.c.b16 %v1486, %v1482
    %v1719 = vpack.c.b16 %v1487, %v1483
    %v1720 = vpack.c.b16 %v1492, %v1488
    %v1721 = vpack.c.b16 %v1493, %v1489
    %v1722 = vpack.c.b16 %v1494, %v1490
    %v1723 = vpack.c.b16 %v1495, %v1491
    %v1724 = vpack.c.b16 %v1500, %v1496
    %v1725 = vpack.c.b16 %v1501, %v1497
    %v1726 = vpack.c.b16 %v1502, %v1498
    %v1727 = vpack.c.b16 %v1503, %v1499
    %v1728 = vpack.c.b16 %v1508, %v1504
    %v1729 = vpack.c.b16 %v1509, %v1505
    %v1730 = vpack.c.b16 %v1510, %v1506
    %v1731 = vpack.c.b16 %v1511, %v1507
    %v1732 = vpack.c.b16 %v1516, %v1512
    %v1733 = vpack.c.b16 %v1517, %v1513
    %v1734 = vpack.c.b16 %v1518, %v1514
    %v1735 = vpack.c.b16 %v1519, %v1515
    %v1736 = vpack.c.b16 %v1524, %v1520
    %v1737 = vpack.c.b16 %v1525, %v1521
    %v1738 = vpack.c.b16 %v1526, %v1522
    %v1739 = vpack.c.b16 %v1527, %v1523
    %v1740 = vpack.c.b16 %v1532, %v1528
    %v1741 = vpack.c.b16 %v1533, %v1529
    %v1742 = vpack.c.b16 %v1534, %v1530
    %v1743 = vpack.c.b16 %v1535, %v1531
    %v1744 = vpack.c.b16 %v1540, %v1536
    %v1745 = vpack.c.b16 %v1541, %v1537
    %v1746 = vpack.c.b16 %v1542, %v1538
    %v1747 = vpack.c.b16 %v1543, %v1539
    %v1748 = vpack.c.b16 %v1548, %v1544
    %v1749 = vpack.c.b16 %v1549, %v1545
    %v1750 = vpack.c.b16 %v1550, %v1546
    %v1751 = vpack.c.b16 %v1551, %v1547
    %v1752 = vpack.c.b16 %v1556, %v1552
    %v1753 = vpack.c.b16 %v1557, %v1553
    %v1754 = vpack.c.b16 %v1558, %v1554
    %v1755 = vpack.c.b16 %v1559, %v1555
    %v1756 = vpack.c.b16 %v1564, %v1560
    %v1757 = vpack.c.b16 %v1565, %v1561
    %v1758 = vpack.c.b16 %v1566, %v1562
    %v1759 = vpack.c.b16 %v1567, %v1563
    %v1760 = vpack.c.b16 %v1572, %v1568
    %v1761 = vpack.c.b16 %v1573, %v1569
    %v1762 = vpack.c.b16 %v1574, %v1570
    %v1763 = vpack.c.b16 %v1575, %v1571
    %v1764 = vpack.c.b16 %v1580, %v1576
    %v1765 = vpack.c.b16 %v1581, %v1577
    %v1766 = vpack.c.b16 %v1582, %v1578
    %v1767 = vpack.c.b16 %v1583, %v1579
    %v1768 = vpack.c.b16 %v1588, %v1584
    %v1769 = vpack.c.b16 %v1589, %v1585
    %v1770 = vpack.c.b16 %v1590, %v1586
    %v1771 = vpack.c.b16 %v1591, %v1587
    %v1772 = vpack.c.b16 %v1596, %v1592
    %v1773 = vpack.c.b16 %v1597, %v1593
    %v1774 = vpack.c.b16 %v1598, %v1594
    %v1775 = vpack.c.b16 %v1599, %v1595
    %v1776 = vpack.c.b16 %v1604, %v1600
    %v1777 = vpack.c.b16 %v1605, %v1601
    %v1778 = vpack.c.b16 %v1606, %v1602
    %v1779 = vpack.c.b16 %v1607, %v1603
    %v1780 = vpack.c.b16 %v1612, %v1608
    %v1781 = vpack.c.b16 %v1613, %v1609
    %v1782 = vpack.c.b16 %v1614, %v1610
    %v1783 = vpack.c.b16 %v1615, %v1611
    %v1784 = vpack.c.b16 %v1620, %v1616
    %v1785 = vpack.c.b16 %v1621, %v1617
    %v1786 = vpack.c.b16 %v1622, %v1618
    %v1787 = vpack.c.b16 %v1623, %v1619
    %v1788 = vpack.c.b16 %v1628, %v1624
    %v1789 = vpack.c.b16 %v1629, %v1625
    %v1790 = vpack.c.b16 %v1630, %v1626
    %v1791 = vpack.c.b16 %v1631, %v1627
    %v1792 = vpack.c.b16 %v1636, %v1632
    %v1793 = vpack.c.b16 %v1637, %v1633
    %v1794 = vpack.c.b16 %v1638, %v1634
    %v1795 = vpack.c.b16 %v1639, %v1635
    %v1796 = vpack.c.b16 %v1644, %v1640
    %v1797 = vpack.c.b16 %v1645, %v1641
    %v1798 = vpack.c.b16 %v1646, %v1642
    %v1799 = vpack.c.b16 %v1647, %v1643
    %v1800 = vpack.c.b16 %v1652, %v1648
    %v1801 = vpack.c.b16 %v1653, %v1649
    %v1802 = vpack.c.b16 %v1654, %v1650
    %v1803 = vpack.c.b16 %v1655, %v1651
    %v1804 = vpack.c.b16 %v1660, %v1656
    %v1805 = vpack.c.b16 %v1661, %v1657
    %v1806 = vpack.c.b16 %v1662, %v1658
    %v1807 = vpack.c.b16 %v1663, %v1659
    %v1808 = vpack.c.b16 %v1668, %v1664
    %v1809 = vpack.c.b16 %v1669, %v1665
    %v1810 = vpack.c.b16 %v1670, %v1666
    %v1811 = vpack.c.b16 %v1671, %v1667
    %v1812 = vpack.c.b16 %v1676, %v1672
    %v1813 = vpack.c.b16 %v1677, %v1673
    %v1814 = vpack.c.b16 %v1678, %v1674
    %v1815 = vpack.c.b16 %v1679, %v1675
    %v1816 = vpack.c.b16 %v1684, %v1680
    %v1817 = vpack.c.b16 %v1685, %v1681
    %v1818 = vpack.c.b16 %v1686, %v1682
    %v1819 = vpack.c.b16 %v1687, %v1683
    %v1820 = vpack.c.b16 %v1692, %v1688
    %v1821 = vpack.c.b16 %v1693, %v1689
    %v1822 = vpack.c.b16 %v1694, %v1690
    %v1823 = vpack.c.b16 %v1695, %v1691
    %1952 = vmatpush.bf16.msra.mxu0 %v1724
    %1953 = vmatpush.bf16.msra.mxu0 %v1720
    %1954 = vmatpush.bf16.msra.mxu0 %v1716
    %1955 = vmatpush.bf16.msra.mxu0 %v1712
    %1956 = vmatpush.bf16.msra.mxu0 %v1708
    %1957 = vmatpush.bf16.msra.mxu0 %v1704
    %1958 = vmatpush.bf16.msra.mxu0 %v1700
    %1959 = vmatpush.bf16.msra.mxu0 %v1696
    %1960 = vmatmul.bf16.gmra.mxu0 %v1170
    %v1961 = vpop.f32.mrf.mxu0
    %v1962 = vadd.f32 %v1304, %v1961
    %v1963 = vpop.f32.mrf.mxu0
    %1964 = vdwg.mxu0
    %1965 = vmatpush.bf16.msra.mxu0 %v1756
    %1966 = vmatpush.bf16.msra.mxu0 %v1752
    %1967 = vmatpush.bf16.msra.mxu0 %v1748
    %1968 = vmatpush.bf16.msra.mxu0 %v1744
    %1969 = vmatpush.bf16.msra.mxu0 %v1740
    %1970 = vmatpush.bf16.msra.mxu0 %v1736
    %1971 = vmatpush.bf16.msra.mxu0 %v1732
    %1972 = vmatpush.bf16.msra.mxu0 %v1728
    %1973 = vmatmul.bf16.gmra.mxu0 %v1171
    %v1974 = vpop.f32.mrf.mxu0
    %v1975 = vadd.f32 %v1962, %v1974
    %v1976 = vpop.f32.mrf.mxu0
    %1977 = vdwg.mxu0
    %1978 = vmatpush.bf16.msra.mxu0 %v1788
    %1979 = vmatpush.bf16.msra.mxu0 %v1784
    %1980 = vmatpush.bf16.msra.mxu0 %v1780
    %1981 = vmatpush.bf16.msra.mxu0 %v1776
    %1982 = vmatpush.bf16.msra.mxu0 %v1772
    %1983 = vmatpush.bf16.msra.mxu0 %v1768
    %1984 = vmatpush.bf16.msra.mxu0 %v1764
    %1985 = vmatpush.bf16.msra.mxu0 %v1760
    %1986 = vmatmul.bf16.gmra.mxu0 %v1172
    %v1987 = vpop.f32.mrf.mxu0
    %v1988 = vadd.f32 %v1975, %v1987
    %v1989 = vpop.f32.mrf.mxu0
    %1990 = vdwg.mxu0
    %1991 = vmatpush.bf16.msra.mxu0 %v1820
    %1992 = vmatpush.bf16.msra.mxu0 %v1816
    %1993 = vmatpush.bf16.msra.mxu0 %v1812
    %1994 = vmatpush.bf16.msra.mxu0 %v1808
    %1995 = vmatpush.bf16.msra.mxu0 %v1804
    %1996 = vmatpush.bf16.msra.mxu0 %v1800
    %1997 = vmatpush.bf16.msra.mxu0 %v1796
    %1998 = vmatpush.bf16.msra.mxu0 %v1792
    %1999 = vmatmul.bf16.gmra.mxu0 %v1173
    %v2000 = vpop.f32.mrf.mxu0
    %v2001 = vadd.f32 %v1988, %v2000
    %v2002 = vpop.f32.mrf.mxu0
    %2003 = vdwg.mxu0
    %2004 = vmatpush.bf16.msra.mxu0 %v1725
    %2005 = vmatpush.bf16.msra.mxu0 %v1721
    %2006 = vmatpush.bf16.msra.mxu0 %v1717
    %2007 = vmatpush.bf16.msra.mxu0 %v1713
    %2008 = vmatpush.bf16.msra.mxu0 %v1709
    %2009 = vmatpush.bf16.msra.mxu0 %v1705
    %2010 = vmatpush.bf16.msra.mxu0 %v1701
    %2011 = vmatpush.bf16.msra.mxu0 %v1697
    %2012 = vmatmul.bf16.gmra.mxu0 %v1170
    %v2013 = vpop.f32.mrf.mxu0
    %v2014 = vadd.f32 %v1305, %v2013
    %v2015 = vpop.f32.mrf.mxu0
    %2016 = vdwg.mxu0
    %2017 = vmatpush.bf16.msra.mxu0 %v1757
    %2018 = vmatpush.bf16.msra.mxu0 %v1753
    %2019 = vmatpush.bf16.msra.mxu0 %v1749
    %2020 = vmatpush.bf16.msra.mxu0 %v1745
    %2021 = vmatpush.bf16.msra.mxu0 %v1741
    %2022 = vmatpush.bf16.msra.mxu0 %v1737
    %2023 = vmatpush.bf16.msra.mxu0 %v1733
    %2024 = vmatpush.bf16.msra.mxu0 %v1729
    %2025 = vmatmul.bf16.gmra.mxu0 %v1171
    %v2026 = vpop.f32.mrf.mxu0
    %v2027 = vadd.f32 %v2014, %v2026
    %v2028 = vpop.f32.mrf.mxu0
    %2029 = vdwg.mxu0
    %2030 = vmatpush.bf16.msra.mxu0 %v1789
    %2031 = vmatpush.bf16.msra.mxu0 %v1785
    %2032 = vmatpush.bf16.msra.mxu0 %v1781
    %2033 = vmatpush.bf16.msra.mxu0 %v1777
    %2034 = vmatpush.bf16.msra.mxu0 %v1773
    %2035 = vmatpush.bf16.msra.mxu0 %v1769
    %2036 = vmatpush.bf16.msra.mxu0 %v1765
    %2037 = vmatpush.bf16.msra.mxu0 %v1761
    %2038 = vmatmul.bf16.gmra.mxu0 %v1172
    %v2039 = vpop.f32.mrf.mxu0
    %v2040 = vadd.f32 %v2027, %v2039
    %v2041 = vpop.f32.mrf.mxu0
    %2042 = vdwg.mxu0
    %2043 = vmatpush.bf16.msra.mxu0 %v1821
    %2044 = vmatpush.bf16.msra.mxu0 %v1817
    %2045 = vmatpush.bf16.msra.mxu0 %v1813
    %2046 = vmatpush.bf16.msra.mxu0 %v1809
    %2047 = vmatpush.bf16.msra.mxu0 %v1805
    %2048 = vmatpush.bf16.msra.mxu0 %v1801
    %2049 = vmatpush.bf16.msra.mxu0 %v1797
    %2050 = vmatpush.bf16.msra.mxu0 %v1793
    %2051 = vmatmul.bf16.gmra.mxu0 %v1173
    %v2052 = vpop.f32.mrf.mxu0
    %v2053 = vadd.f32 %v2040, %v2052
    %v2054 = vpop.f32.mrf.mxu0
    %2055 = vdwg.mxu0
    %2056 = vmatpush.bf16.msra.mxu0 %v1726
    %2057 = vmatpush.bf16.msra.mxu0 %v1722
    %2058 = vmatpush.bf16.msra.mxu0 %v1718
    %2059 = vmatpush.bf16.msra.mxu0 %v1714
    %2060 = vmatpush.bf16.msra.mxu0 %v1710
    %2061 = vmatpush.bf16.msra.mxu0 %v1706
    %2062 = vmatpush.bf16.msra.mxu0 %v1702
    %2063 = vmatpush.bf16.msra.mxu0 %v1698
    %2064 = vmatmul.bf16.gmra.mxu0 %v1170
    %v2065 = vpop.f32.mrf.mxu0
    %v2066 = vadd.f32 %v1306, %v2065
    %v2067 = vpop.f32.mrf.mxu0
    %2068 = vdwg.mxu0
    %2069 = vmatpush.bf16.msra.mxu0 %v1758
    %2070 = vmatpush.bf16.msra.mxu0 %v1754
    %2071 = vmatpush.bf16.msra.mxu0 %v1750
    %2072 = vmatpush.bf16.msra.mxu0 %v1746
    %2073 = vmatpush.bf16.msra.mxu0 %v1742
    %2074 = vmatpush.bf16.msra.mxu0 %v1738
    %2075 = vmatpush.bf16.msra.mxu0 %v1734
    %2076 = vmatpush.bf16.msra.mxu0 %v1730
    %2077 = vmatmul.bf16.gmra.mxu0 %v1171
    %v2078 = vpop.f32.mrf.mxu0
    %v2079 = vadd.f32 %v2066, %v2078
    %v2080 = vpop.f32.mrf.mxu0
    %2081 = vdwg.mxu0
    %2082 = vmatpush.bf16.msra.mxu0 %v1790
    %2083 = vmatpush.bf16.msra.mxu0 %v1786
    %2084 = vmatpush.bf16.msra.mxu0 %v1782
    %2085 = vmatpush.bf16.msra.mxu0 %v1778
    %2086 = vmatpush.bf16.msra.mxu0 %v1774
    %2087 = vmatpush.bf16.msra.mxu0 %v1770
    %2088 = vmatpush.bf16.msra.mxu0 %v1766
    %2089 = vmatpush.bf16.msra.mxu0 %v1762
    %2090 = vmatmul.bf16.gmra.mxu0 %v1172
    %v2091 = vpop.f32.mrf.mxu0
    %v2092 = vadd.f32 %v2079, %v2091
    %v2093 = vpop.f32.mrf.mxu0
    %2094 = vdwg.mxu0
    %2095 = vmatpush.bf16.msra.mxu0 %v1822
    %2096 = vmatpush.bf16.msra.mxu0 %v1818
    %2097 = vmatpush.bf16.msra.mxu0 %v1814
    %2098 = vmatpush.bf16.msra.mxu0 %v1810
    %2099 = vmatpush.bf16.msra.mxu0 %v1806
    %2100 = vmatpush.bf16.msra.mxu0 %v1802
    %2101 = vmatpush.bf16.msra.mxu0 %v1798
    %2102 = vmatpush.bf16.msra.mxu0 %v1794
    %2103 = vmatmul.bf16.gmra.mxu0 %v1173
    %v2104 = vpop.f32.mrf.mxu0
    %v2105 = vadd.f32 %v2092, %v2104
    %v2106 = vpop.f32.mrf.mxu0
    %2107 = vdwg.mxu0
    %2108 = vmatpush.bf16.msra.mxu0 %v1727
    %2109 = vmatpush.bf16.msra.mxu0 %v1723
    %2110 = vmatpush.bf16.msra.mxu0 %v1719
    %2111 = vmatpush.bf16.msra.mxu0 %v1715
    %2112 = vmatpush.bf16.msra.mxu0 %v1711
    %2113 = vmatpush.bf16.msra.mxu0 %v1707
    %2114 = vmatpush.bf16.msra.mxu0 %v1703
    %2115 = vmatpush.bf16.msra.mxu0 %v1699
    %2116 = vmatmul.bf16.gmra.mxu0 %v1170
    %v2117 = vpop.f32.mrf.mxu0
    %v2118 = vadd.f32 %v1307, %v2117
    %v2119 = vpop.f32.mrf.mxu0
    %2120 = vdwg.mxu0
    %2121 = vmatpush.bf16.msra.mxu0 %v1759
    %2122 = vmatpush.bf16.msra.mxu0 %v1755
    %2123 = vmatpush.bf16.msra.mxu0 %v1751
    %2124 = vmatpush.bf16.msra.mxu0 %v1747
    %2125 = vmatpush.bf16.msra.mxu0 %v1743
    %2126 = vmatpush.bf16.msra.mxu0 %v1739
    %2127 = vmatpush.bf16.msra.mxu0 %v1735
    %2128 = vmatpush.bf16.msra.mxu0 %v1731
    %2129 = vmatmul.bf16.gmra.mxu0 %v1171
    %v2130 = vpop.f32.mrf.mxu0
    %v2131 = vadd.f32 %v2118, %v2130
    %v2132 = vpop.f32.mrf.mxu0
    %2133 = vdwg.mxu0
    %2134 = vmatpush.bf16.msra.mxu0 %v1791
    %2135 = vmatpush.bf16.msra.mxu0 %v1787
    %2136 = vmatpush.bf16.msra.mxu0 %v1783
    %2137 = vmatpush.bf16.msra.mxu0 %v1779
    %2138 = vmatpush.bf16.msra.mxu0 %v1775
    %2139 = vmatpush.bf16.msra.mxu0 %v1771
    %2140 = vmatpush.bf16.msra.mxu0 %v1767
    %2141 = vmatpush.bf16.msra.mxu0 %v1763
    %2142 = vmatmul.bf16.gmra.mxu0 %v1172
    %v2143 = vpop.f32.mrf.mxu0
    %v2144 = vadd.f32 %v2131, %v2143
    %v2145 = vpop.f32.mrf.mxu0
    %2146 = vdwg.mxu0
    %2147 = vmatpush.bf16.msra.mxu0 %v1823
    %2148 = vmatpush.bf16.msra.mxu0 %v1819
    %2149 = vmatpush.bf16.msra.mxu0 %v1815
    %2150 = vmatpush.bf16.msra.mxu0 %v1811
    %2151 = vmatpush.bf16.msra.mxu0 %v1807
    %2152 = vmatpush.bf16.msra.mxu0 %v1803
    %2153 = vmatpush.bf16.msra.mxu0 %v1799
    %2154 = vmatpush.bf16.msra.mxu0 %v1795
    %2155 = vmatmul.bf16.gmra.mxu0 %v1173
    %v2156 = vpop.f32.mrf.mxu0
    %v2157 = vadd.f32 %v2144, %v2156
    %v2158 = vpop.f32.mrf.mxu0
    %2159 = vdwg.mxu0
    %vm2160 = vcmp.gt.f32.partialorder %v2001, 0.0
    %vm2161 = vcmp.gt.f32.partialorder %v2053, 0.0
    %vm2162 = vcmp.gt.f32.partialorder %v2105, 0.0
    %vm2163 = vcmp.gt.f32.partialorder %v2157, 0.0
    %v2164 = vmul.f32 %v2001, 0.01
    %v2165 = vmul.f32 %v2053, 0.01
    %v2166 = vmul.f32 %v2105, 0.01
    %v2167 = vmul.f32 %v2157, 0.01
    %v2168 = vsel %vm2160, %v2001, %v2164
    %v2169 = vsel %vm2161, %v2053, %v2165
    %v2170 = vsel %vm2162, %v2105, %v2166
    %v2171 = vsel %vm2163, %v2157, %v2167
    %v2172 = vpack.c.bf16 %v2168, %v2168
    %v2173 = vpack.c.bf16 %v2169, %v2169
    %v2174 = vpack.c.bf16 %v2170, %v2170
    %v2175 = vpack.c.bf16 %v2171, %v2171
    %v2176 = vld [vmem:[%s7] sm:$0xf]
    %v2177 = vld [vmem:[%s7 + $0x4] sm:$0xf]
    %v2178 = vld [vmem:[%s7 + $0x8] sm:$0xf]
    %v2179 = vld [vmem:[%s7 + $0xc] sm:$0xf]
    %v2180 = vld [vmem:[%s7 + $0x10] sm:$0xf]
    %v2181 = vld [vmem:[%s7 + $0x14] sm:$0xf]
    %v2182 = vld [vmem:[%s7 + $0x18] sm:$0xf]
    %v2183 = vld [vmem:[%s7 + $0x1c] sm:$0xf]
    %v2184 = vld [vmem:[%s7 + $0x20] sm:$0xf]
    %v2185 = vld [vmem:[%s7 + $0x24] sm:$0xf]
    %v2186 = vld [vmem:[%s7 + $0x28] sm:$0xf]
    %v2187 = vld [vmem:[%s7 + $0x2c] sm:$0xf]
    %v2188 = vld [vmem:[%s7 + $0x30] sm:$0xf]
    %v2189 = vld [vmem:[%s7 + $0x34] sm:$0xf]
    %v2190 = vld [vmem:[%s7 + $0x38] sm:$0xf]
    %v2191 = vld [vmem:[%s7 + $0x3c] sm:$0xf]
    %v2192 = vld [vmem:[%s7 + $0x40] sm:$0xf]
    %v2193 = vld [vmem:[%s7 + $0x44] sm:$0xf]
    %v2194 = vld [vmem:[%s7 + $0x48] sm:$0xf]
    %v2195 = vld [vmem:[%s7 + $0x4c] sm:$0xf]
    %v2196 = vld [vmem:[%s7 + $0x50] sm:$0xf]
    %v2197 = vld [vmem:[%s7 + $0x54] sm:$0xf]
    %v2198 = vld [vmem:[%s7 + $0x58] sm:$0xf]
    %v2199 = vld [vmem:[%s7 + $0x5c] sm:$0xf]
    %v2200 = vld [vmem:[%s7 + $0x60] sm:$0xf]
    %v2201 = vld [vmem:[%s7 + $0x64] sm:$0xf]
    %v2202 = vld [vmem:[%s7 + $0x68] sm:$0xf]
    %v2203 = vld [vmem:[%s7 + $0x6c] sm:$0xf]
    %v2204 = vld [vmem:[%s7 + $0x70] sm:$0xf]
    %v2205 = vld [vmem:[%s7 + $0x74] sm:$0xf]
    %v2206 = vld [vmem:[%s7 + $0x78] sm:$0xf]
    %v2207 = vld [vmem:[%s7 + $0x7c] sm:$0xf]
    %v2208 = vld [vmem:[%s7 + $0x80] sm:$0xf]
    %v2209 = vld [vmem:[%s7 + $0x84] sm:$0xf]
    %v2210 = vld [vmem:[%s7 + $0x88] sm:$0xf]
    %v2211 = vld [vmem:[%s7 + $0x8c] sm:$0xf]
    %v2212 = vld [vmem:[%s7 + $0x90] sm:$0xf]
    %v2213 = vld [vmem:[%s7 + $0x94] sm:$0xf]
    %v2214 = vld [vmem:[%s7 + $0x98] sm:$0xf]
    %v2215 = vld [vmem:[%s7 + $0x9c] sm:$0xf]
    %v2216 = vld [vmem:[%s7 + $0xa0] sm:$0xf]
    %v2217 = vld [vmem:[%s7 + $0xa4] sm:$0xf]
    %v2218 = vld [vmem:[%s7 + $0xa8] sm:$0xf]
    %v2219 = vld [vmem:[%s7 + $0xac] sm:$0xf]
    %v2220 = vld [vmem:[%s7 + $0xb0] sm:$0xf]
    %v2221 = vld [vmem:[%s7 + $0xb4] sm:$0xf]
    %v2222 = vld [vmem:[%s7 + $0xb8] sm:$0xf]
    %v2223 = vld [vmem:[%s7 + $0xbc] sm:$0xf]
    %v2224 = vld [vmem:[%s7 + $0xc0] sm:$0xf]
    %v2225 = vld [vmem:[%s7 + $0xc4] sm:$0xf]
    %v2226 = vld [vmem:[%s7 + $0xc8] sm:$0xf]
    %v2227 = vld [vmem:[%s7 + $0xcc] sm:$0xf]
    %v2228 = vld [vmem:[%s7 + $0xd0] sm:$0xf]
    %v2229 = vld [vmem:[%s7 + $0xd4] sm:$0xf]
    %v2230 = vld [vmem:[%s7 + $0xd8] sm:$0xf]
    %v2231 = vld [vmem:[%s7 + $0xdc] sm:$0xf]
    %v2232 = vld [vmem:[%s7 + $0xe0] sm:$0xf]
    %v2233 = vld [vmem:[%s7 + $0xe4] sm:$0xf]
    %v2234 = vld [vmem:[%s7 + $0xe8] sm:$0xf]
    %v2235 = vld [vmem:[%s7 + $0xec] sm:$0xf]
    %v2236 = vld [vmem:[%s7 + $0xf0] sm:$0xf]
    %v2237 = vld [vmem:[%s7 + $0xf4] sm:$0xf]
    %v2238 = vld [vmem:[%s7 + $0xf8] sm:$0xf]
    %v2239 = vld [vmem:[%s7 + $0xfc] sm:$0xf]
    %v2240 = vld [vmem:[%s8] sm:$0x1]
    %v2242 = vperm.slane %v2240, 0
    %v2308 = vunpack.c.l.b16 %v2176
    %v2309 = vunpack.c.l.b16 %v2177
    %v2310 = vunpack.c.l.b16 %v2178
    %v2311 = vunpack.c.l.b16 %v2179
    %v2312 = vunpack.c.l.b16 %v2180
    %v2313 = vunpack.c.l.b16 %v2181
    %v2314 = vunpack.c.l.b16 %v2182
    %v2315 = vunpack.c.l.b16 %v2183
    %v2316 = vunpack.c.l.b16 %v2184
    %v2317 = vunpack.c.l.b16 %v2185
    %v2318 = vunpack.c.l.b16 %v2186
    %v2319 = vunpack.c.l.b16 %v2187
    %v2320 = vunpack.c.l.b16 %v2188
    %v2321 = vunpack.c.l.b16 %v2189
    %v2322 = vunpack.c.l.b16 %v2190
    %v2323 = vunpack.c.l.b16 %v2191
    %v2324 = vunpack.c.l.b16 %v2192
    %v2325 = vunpack.c.l.b16 %v2193
    %v2326 = vunpack.c.l.b16 %v2194
    %v2327 = vunpack.c.l.b16 %v2195
    %v2328 = vunpack.c.l.b16 %v2196
    %v2329 = vunpack.c.l.b16 %v2197
    %v2330 = vunpack.c.l.b16 %v2198
    %v2331 = vunpack.c.l.b16 %v2199
    %v2332 = vunpack.c.l.b16 %v2200
    %v2333 = vunpack.c.l.b16 %v2201
    %v2334 = vunpack.c.l.b16 %v2202
    %v2335 = vunpack.c.l.b16 %v2203
    %v2336 = vunpack.c.l.b16 %v2204
    %v2337 = vunpack.c.l.b16 %v2205
    %v2338 = vunpack.c.l.b16 %v2206
    %v2339 = vunpack.c.l.b16 %v2207
    %v2340 = vunpack.c.l.b16 %v2208
    %v2341 = vunpack.c.l.b16 %v2209
    %v2342 = vunpack.c.l.b16 %v2210
    %v2343 = vunpack.c.l.b16 %v2211
    %v2344 = vunpack.c.l.b16 %v2212
    %v2345 = vunpack.c.l.b16 %v2213
    %v2346 = vunpack.c.l.b16 %v2214
    %v2347 = vunpack.c.l.b16 %v2215
    %v2348 = vunpack.c.l.b16 %v2216
    %v2349 = vunpack.c.l.b16 %v2217
    %v2350 = vunpack.c.l.b16 %v2218
    %v2351 = vunpack.c.l.b16 %v2219
    %v2352 = vunpack.c.l.b16 %v2220
    %v2353 = vunpack.c.l.b16 %v2221
    %v2354 = vunpack.c.l.b16 %v2222
    %v2355 = vunpack.c.l.b16 %v2223
    %v2356 = vunpack.c.l.b16 %v2224
    %v2357 = vunpack.c.l.b16 %v2225
    %v2358 = vunpack.c.l.b16 %v2226
    %v2359 = vunpack.c.l.b16 %v2227
    %v2360 = vunpack.c.l.b16 %v2228
    %v2361 = vunpack.c.l.b16 %v2229
    %v2362 = vunpack.c.l.b16 %v2230
    %v2363 = vunpack.c.l.b16 %v2231
    %v2364 = vunpack.c.l.b16 %v2232
    %v2365 = vunpack.c.l.b16 %v2233
    %v2366 = vunpack.c.l.b16 %v2234
    %v2367 = vunpack.c.l.b16 %v2235
    %v2368 = vunpack.c.l.b16 %v2236
    %v2369 = vunpack.c.l.b16 %v2237
    %v2370 = vunpack.c.l.b16 %v2238
    %v2371 = vunpack.c.l.b16 %v2239
    %v2372 = vpack.c.b16 %v2309, %v2308
    %v2373 = vpack.c.b16 %v2311, %v2310
    %v2374 = vpack.c.b16 %v2313, %v2312
    %v2375 = vpack.c.b16 %v2315, %v2314
    %v2376 = vpack.c.b16 %v2317, %v2316
    %v2377 = vpack.c.b16 %v2319, %v2318
    %v2378 = vpack.c.b16 %v2321, %v2320
    %v2379 = vpack.c.b16 %v2323, %v2322
    %v2380 = vpack.c.b16 %v2325, %v2324
    %v2381 = vpack.c.b16 %v2327, %v2326
    %v2382 = vpack.c.b16 %v2329, %v2328
    %v2383 = vpack.c.b16 %v2331, %v2330
    %v2384 = vpack.c.b16 %v2333, %v2332
    %v2385 = vpack.c.b16 %v2335, %v2334
    %v2386 = vpack.c.b16 %v2337, %v2336
    %v2387 = vpack.c.b16 %v2339, %v2338
    %v2388 = vpack.c.b16 %v2341, %v2340
    %v2389 = vpack.c.b16 %v2343, %v2342
    %v2390 = vpack.c.b16 %v2345, %v2344
    %v2391 = vpack.c.b16 %v2347, %v2346
    %v2392 = vpack.c.b16 %v2349, %v2348
    %v2393 = vpack.c.b16 %v2351, %v2350
    %v2394 = vpack.c.b16 %v2353, %v2352
    %v2395 = vpack.c.b16 %v2355, %v2354
    %v2396 = vpack.c.b16 %v2357, %v2356
    %v2397 = vpack.c.b16 %v2359, %v2358
    %v2398 = vpack.c.b16 %v2361, %v2360
    %v2399 = vpack.c.b16 %v2363, %v2362
    %v2400 = vpack.c.b16 %v2365, %v2364
    %v2401 = vpack.c.b16 %v2367, %v2366
    %v2402 = vpack.c.b16 %v2369, %v2368
    %v2403 = vpack.c.b16 %v2371, %v2370
    %2436 = vmatpush.bf16.msra.mxu0 %v2379
    %2437 = vmatpush.bf16.msra.mxu0 %v2378
    %2438 = vmatpush.bf16.msra.mxu0 %v2377
    %2439 = vmatpush.bf16.msra.mxu0 %v2376
    %2440 = vmatpush.bf16.msra.mxu0 %v2375
    %2441 = vmatpush.bf16.msra.mxu0 %v2374
    %2442 = vmatpush.bf16.msra.mxu0 %v2373
    %2443 = vmatpush.bf16.msra.mxu0 %v2372
    %2444 = vmatmul.bf16.gmra.mxu0 %v2172
    %v2445 = vpop.f32.mrf.mxu0
    %v2446 = vadd.f32 %v2242, %v2445
    %v2447 = vpop.f32.mrf.mxu0
    %2448 = vdwg.mxu0
    %2449 = vmatpush.bf16.msra.mxu0 %v2387
    %2450 = vmatpush.bf16.msra.mxu0 %v2386
    %2451 = vmatpush.bf16.msra.mxu0 %v2385
    %2452 = vmatpush.bf16.msra.mxu0 %v2384
    %2453 = vmatpush.bf16.msra.mxu0 %v2383
    %2454 = vmatpush.bf16.msra.mxu0 %v2382
    %2455 = vmatpush.bf16.msra.mxu0 %v2381
    %2456 = vmatpush.bf16.msra.mxu0 %v2380
    %2457 = vmatmul.bf16.gmra.mxu0 %v2173
    %v2458 = vpop.f32.mrf.mxu0
    %v2459 = vadd.f32 %v2446, %v2458
    %v2460 = vpop.f32.mrf.mxu0
    %2461 = vdwg.mxu0
    %2462 = vmatpush.bf16.msra.mxu0 %v2395
    %2463 = vmatpush.bf16.msra.mxu0 %v2394
    %2464 = vmatpush.bf16.msra.mxu0 %v2393
    %2465 = vmatpush.bf16.msra.mxu0 %v2392
    %2466 = vmatpush.bf16.msra.mxu0 %v2391
    %2467 = vmatpush.bf16.msra.mxu0 %v2390
    %2468 = vmatpush.bf16.msra.mxu0 %v2389
    %2469 = vmatpush.bf16.msra.mxu0 %v2388
    %2470 = vmatmul.bf16.gmra.mxu0 %v2174
    %v2471 = vpop.f32.mrf.mxu0
    %v2472 = vadd.f32 %v2459, %v2471
    %v2473 = vpop.f32.mrf.mxu0
    %2474 = vdwg.mxu0
    %2475 = vmatpush.bf16.msra.mxu0 %v2403
    %2476 = vmatpush.bf16.msra.mxu0 %v2402
    %2477 = vmatpush.bf16.msra.mxu0 %v2401
    %2478 = vmatpush.bf16.msra.mxu0 %v2400
    %2479 = vmatpush.bf16.msra.mxu0 %v2399
    %2480 = vmatpush.bf16.msra.mxu0 %v2398
    %2481 = vmatpush.bf16.msra.mxu0 %v2397
    %2482 = vmatpush.bf16.msra.mxu0 %v2396
    %2483 = vmatmul.bf16.gmra.mxu0 %v2175
    %v2484 = vpop.f32.mrf.mxu0
    %v2485 = vadd.f32 %v2472, %v2484
    %v2486 = vpop.f32.mrf.mxu0
    %2487 = vdwg.mxu0
    %vm2488 = vcmask 64512
    %2489 = vst.msk [vmem:[%s9] sm:$0xff] %vm2488, %v2485
    // Predicated region
    $region46: #{dqn_forward.1} parent=1 // pred_check
      _
    $region47: #{dqn_forward.1} parent=1 // pred_check_branch
      %2491 = sbr.rel (0) target = $region49
    $region48: #{dqn_forward.1} parent=1 // pred_region
      _
    $region49: #{dqn_forward.1} parent=1 // pred_fallthru
      _
    // Predicated region
    $region50: #{dqn_forward.1} parent=1 // pred_check
      _
    $region51: #{dqn_forward.1} parent=1 // pred_check_branch
      %2493 = sbr.rel (0) target = $region53
    $region52: #{dqn_forward.1} parent=1 // pred_region
      _
    $region53: #{dqn_forward.1} parent=1 // pred_fallthru
      _
    %2494 = vsyncpa [#allocation3], 1
    %2495 = vsyncpa [#allocation5], 1

</llo_original>
